<compile_context>
chip_gen: v7x
topology: tpu7x:2x2x1
jax: 0.10.0
libtpu: 0.0.40
codegen_flags: <defaults>
</compile_context>

<pallas_src>
import functools

import jax
import jax.numpy as jnp
from jax.experimental import pallas as pl
from jax.experimental.pallas import tpu as pltpu


# ---------------------------------------------------------------------------
# Pallas kernel: one (batch, row-tile) step of the stride-2 3x3 conv
# ---------------------------------------------------------------------------
def _conv3x3s2_kernel(p_ee, p_eo, p_oe, p_oo, w_ref, b_ref, o_ref, *,
                      toh, ow, oc, c):
    """
    p_** : (toh+1, ow+1, C)  bf16 parity planes of the padded input, haloed by
                             one extra row/col so all 9 taps are static slices.
    w_ref: (9, OC, C)        bf16 conv weights, tap-major (t = kh*3 + kw).
    b_ref: (OC, 1)           f32 bias.
    o_ref: (OC, toh*ow)      f32 output tile (lane-dense: spatial on lanes).
    """
    planes = ((p_ee, p_eo), (p_oe, p_oo))          # [row_parity][col_parity]
    s = toh * ow
    acc = None
    for kh in range(3):
        for kw in range(3):
            p_ref = planes[kh % 2][kw % 2]
            dr, dc = kh // 2, kw // 2
            tap = p_ref[dr:dr + toh, dc:dc + ow, :]          # (toh, ow, C)
            tap2d = tap.reshape(s, c)                        # (S, C), C on lanes
            w_t = w_ref[kh * 3 + kw]                         # (OC, C)
            # (OC, C) x (S, C)^T -> (OC, S): contract last dims of both (MXU).
            part = jax.lax.dot_general(
                w_t, tap2d,
                dimension_numbers=(((1,), (1,)), ((), ())),
                preferred_element_type=jnp.float32)
            acc = part if acc is None else acc + part
    o_ref[...] = (acc + b_ref[...]).astype(o_ref.dtype)


def _choose_row_tile(oh, ow, c):
    """Largest output-row tile such that
       (a) the 4 bf16 input planes (double-buffered by the pipeline) fit a
           conservative VMEM budget (sized with v7x's 64 MiB VMEM in mind);
       (b) the f32 accumulator (OC, toh*ow) stays a sane size (S <= 4096)."""
    plane_budget = 6 * 1024 * 1024                 # bytes, single-buffered
    bytes_per_row = 4 * (ow + 1) * c * 2           # 4 planes * bf16
    max_by_vmem = plane_budget // max(bytes_per_row, 1) - 1
    max_by_acc = max(1, 4096 // max(ow, 1))        # keep S = toh*ow moderate
    return int(max(1, min(oh, max_by_vmem, max_by_acc)))


# ---------------------------------------------------------------------------
# Conv_Delta forward: conv2d(k=3, stride=2, pad=1), NCHW in / NCHW out
# ---------------------------------------------------------------------------
@jax.jit
def conv_delta_forward(x_nchw, weight, bias):
    """
    x_nchw : (N, C, H, W)    float32
    weight : (OC, C, 3, 3)   float32   (PyTorch Conv2d layout)
    bias   : (OC,)           float32
    returns: (N, OC, OH, OW) float32   (== PyTorch Conv2d(k=3, s=2, p=1))
    """
    n, c, h, w = x_nchw.shape
    oc = weight.shape[0]
    oh = (h + 2 - 3) // 2 + 1
    ow = (w + 2 - 3) // 2 + 1

    toh = _choose_row_tile(oh, ow, c)
    n_t = -(-oh // toh)
    oh_p = n_t * toh
    s = toh * ow

    # --- single fused input rearrangement: NCHW -> NHWC, bf16, zero-pad,
    #     space-to-depth parity split, row-halo tiling ----------------------
    xh = jnp.transpose(x_nchw, (0, 2, 3, 1)).astype(jnp.bfloat16)
    pad_b = 2 * oh_p + 1 - h          # >= the conv's own bottom pad of 1
    pad_r = 2 * ow + 1 - w            # >= the conv's own right pad of 1
    xp = jnp.pad(xh, ((0, 0), (1, pad_b), (1, pad_r), (0, 0)))

    plane_tiles = []
    for pr in range(2):
        for pc in range(2):
            p = xp[:, pr::2, pc::2, :]                       # (N, oh_p+1, ow+1, C)
            tiles = jnp.stack(
                [p[:, t * toh:t * toh + toh + 1] for t in range(n_t)], axis=1)
            plane_tiles.append(tiles)                        # (N, n_t, toh+1, ow+1, C)

    # weight (OC, C, 3, 3) -> (9, OC, C), tap-major, matching kernel order.
    w9 = jnp.transpose(weight, (2, 3, 0, 1)).reshape(9, oc, c).astype(jnp.bfloat16)
    b2 = bias.reshape(oc, 1).astype(jnp.float32)

    plane_spec = pl.BlockSpec((None, None, toh + 1, ow + 1, c),
                              lambda i, t: (i, t, 0, 0, 0))
    kernel = functools.partial(_conv3x3s2_kernel, toh=toh, ow=ow, oc=oc, c=c)

    # Advisory cost hint for the XLA scheduler around the custom call.
    flops = 2 * 9 * n * n_t * oc * c * s
    bytes_in = 4 * n * n_t * (toh + 1) * (ow + 1) * c * 2
    bytes_out = n * n_t * oc * s * 4
    cost = pl.CostEstimate(flops=int(flops), transcendentals=0,
                           bytes_accessed=int(bytes_in + bytes_out
                                              + w9.size * 2 + b2.size * 4))

    out = pl.pallas_call(
        kernel,
        out_shape=jax.ShapeDtypeStruct((n, n_t, oc, s), jnp.float32),
        grid_spec=pltpu.PrefetchScalarGridSpec(
            num_scalar_prefetch=0,
            grid=(n, n_t),
            in_specs=[plane_spec] * 4 + [
                pl.BlockSpec((9, oc, c), lambda i, t: (0, 0, 0)),
                pl.BlockSpec((oc, 1), lambda i, t: (0, 0)),
            ],
            out_specs=pl.BlockSpec((None, None, oc, s),
                                   lambda i, t: (i, t, 0, 0)),
        ),
        compiler_params=pltpu.CompilerParams(
            dimension_semantics=("parallel", "parallel"),
            vmem_limit_bytes=32 * 1024 * 1024),
        cost_estimate=cost,
    )(*plane_tiles, w9, b2)

    # --- glue back to NCHW: reshape + leading-axis transpose only ----------
    out = out.reshape(n, n_t, oc, toh, ow)
    out = jnp.transpose(out, (0, 2, 1, 3, 4)).reshape(n, oc, oh_p, ow)
    return out[:, :, :oh, :]


# ---------------------------------------------------------------------------
# Demo / check
# ---------------------------------------------------------------------------
if __name__ == "__main__":
    # Shapes consistent with the module:
    #   feature_size = 32, num_anchor_points = 4 -> out_channels = 8
    batch, feature_size, spatial = 2, 32, 16
    num_anchor_points = 4
    out_channels = num_anchor_points * 2

    key = jax.random.PRNGKey(0)
    kx, kw, kb = jax.random.split(key, 3)

    x = jax.random.normal(kx, (batch, feature_size, spatial, spatial),
                          dtype=jnp.float32)
    fan_in = feature_size * 3 * 3
    weight = jax.random.normal(
        kw, (out_channels, feature_size, 3, 3), dtype=jnp.float32
    ) * (1.0 / jnp.sqrt(fan_in))
    bias = jax.random.normal(kb, (out_channels,), dtype=jnp.float32) * 0.01

    out = conv_delta_forward(x, weight, bias)
    out = jax.block_until_ready(out)

    # Reference: XLA f32 conv (same semantics as PyTorch Conv2d).  The kernel
    # uses bf16 inputs/weights with f32 accumulation, hence the loose tol.
    ref = jax.lax.conv_general_dilated(
        x, weight, window_strides=(2, 2), padding=((1, 1), (1, 1)),
        dimension_numbers=("NCHW", "OIHW", "NCHW"),
    ) + bias.reshape(1, -1, 1, 1)

    assert out.shape == (batch, out_channels, spatial // 2, spatial // 2)
    assert bool(jnp.allclose(out, ref, atol=5e-2, rtol=5e-2))

    print("KERNEL_OK")
</pallas_src>

<mosaic_0001>
module attributes {stable_mosaic.version = 11 : i64} {
  func.func @_conv3x3s2_kernel(%arg0: i32, %arg1: i32, %arg2: memref<1x1x9x9x32xbf16, #tpu.memory_space<vmem>>, %arg3: memref<1x1x9x9x32xbf16, #tpu.memory_space<vmem>>, %arg4: memref<1x1x9x9x32xbf16, #tpu.memory_space<vmem>>, %arg5: memref<1x1x9x9x32xbf16, #tpu.memory_space<vmem>>, %arg6: memref<9x8x32xbf16, #tpu.memory_space<vmem>>, %arg7: memref<8x1xf32, #tpu.memory_space<vmem>>, %arg8: memref<1x1x8x64xf32, #tpu.memory_space<vmem>>) attributes {dimension_semantics = [#tpu.dimension_semantics<parallel>, #tpu.dimension_semantics<parallel>], iteration_bounds = array<i64: 2, 1>, scalar_prefetch = 0 : i64, scratch_operands = 0 : i64, tpu.core_type = #tpu.core_type<tc>, window_params = [{transform_indices = @transform_0, window_bounds = array<i64: 1, 1, 9, 9, 32>}, {transform_indices = @transform_1, window_bounds = array<i64: 1, 1, 9, 9, 32>}, {transform_indices = @transform_2, window_bounds = array<i64: 1, 1, 9, 9, 32>}, {transform_indices = @transform_3, window_bounds = array<i64: 1, 1, 9, 9, 32>}, {pipeline_mode = #tpu.pipeline_mode<synchronous>, transform_indices = @transform_4, window_bounds = array<i64: 9, 8, 32>}, {pipeline_mode = #tpu.pipeline_mode<synchronous>, transform_indices = @transform_5, window_bounds = array<i64: 8, 1>}, {transform_indices = @transform_6, window_bounds = array<i64: 1, 1, 8, 64>}]} {
    %c0 = arith.constant 0 : index
    %c0_0 = arith.constant 0 : index
    %c0_1 = arith.constant 0 : index
    %c0_2 = arith.constant 0 : index
    %c0_3 = arith.constant 0 : index
    %0 = vector.load %arg2[%c0, %c0_0, %c0_1, %c0_2, %c0_3] : memref<1x1x9x9x32xbf16, #tpu.memory_space<vmem>>, vector<1x1x8x8x32xbf16>
    %1 = vector.shape_cast %0 : vector<1x1x8x8x32xbf16> to vector<8x8x32xbf16>
    %2 = vector.shape_cast %1 : vector<8x8x32xbf16> to vector<64x32xbf16>
    %c0_4 = arith.constant 0 : index
    %c0_5 = arith.constant 0 : index
    %c0_6 = arith.constant 0 : index
    %3 = vector.load %arg6[%c0_4, %c0_5, %c0_6] : memref<9x8x32xbf16, #tpu.memory_space<vmem>>, vector<1x8x32xbf16>
    %4 = vector.shape_cast %3 : vector<1x8x32xbf16> to vector<8x32xbf16>
    %cst = arith.constant dense<0.000000e+00> : vector<8x64xf32>
    %5 = tpu.matmul %4, %2, %cst {dimension_numbers = #tpu.dot_dimension_numbers<[1], [1], [0], [0], [0, 0, 1, 0], [], []>} : vector<8x32xbf16>, vector<64x32xbf16>, vector<8x64xf32> -> vector<8x64xf32>
    %c0_7 = arith.constant 0 : index
    %c0_8 = arith.constant 0 : index
    %c0_9 = arith.constant 0 : index
    %c0_10 = arith.constant 0 : index
    %c0_11 = arith.constant 0 : index
    %6 = vector.load %arg3[%c0_7, %c0_8, %c0_9, %c0_10, %c0_11] : memref<1x1x9x9x32xbf16, #tpu.memory_space<vmem>>, vector<1x1x8x8x32xbf16>
    %7 = vector.shape_cast %6 : vector<1x1x8x8x32xbf16> to vector<8x8x32xbf16>
    %8 = vector.shape_cast %7 : vector<8x8x32xbf16> to vector<64x32xbf16>
    %c1 = arith.constant 1 : index
    %c0_12 = arith.constant 0 : index
    %c0_13 = arith.constant 0 : index
    %9 = vector.load %arg6[%c1, %c0_12, %c0_13] : memref<9x8x32xbf16, #tpu.memory_space<vmem>>, vector<1x8x32xbf16>
    %10 = vector.shape_cast %9 : vector<1x8x32xbf16> to vector<8x32xbf16>
    %cst_14 = arith.constant dense<0.000000e+00> : vector<8x64xf32>
    %11 = tpu.matmul %10, %8, %cst_14 {dimension_numbers = #tpu.dot_dimension_numbers<[1], [1], [0], [0], [0, 0, 1, 0], [], []>} : vector<8x32xbf16>, vector<64x32xbf16>, vector<8x64xf32> -> vector<8x64xf32>
    %12 = arith.addf %5, %11 : vector<8x64xf32>
    %c0_15 = arith.constant 0 : index
    %c0_16 = arith.constant 0 : index
    %c0_17 = arith.constant 0 : index
    %c1_18 = arith.constant 1 : index
    %c0_19 = arith.constant 0 : index
    %13 = vector.load %arg2[%c0_15, %c0_16, %c0_17, %c1_18, %c0_19] : memref<1x1x9x9x32xbf16, #tpu.memory_space<vmem>>, vector<1x1x8x8x32xbf16>
    %14 = vector.shape_cast %13 : vector<1x1x8x8x32xbf16> to vector<8x8x32xbf16>
    %15 = vector.shape_cast %14 : vector<8x8x32xbf16> to vector<64x32xbf16>
    %c2 = arith.constant 2 : index
    %c0_20 = arith.constant 0 : index
    %c0_21 = arith.constant 0 : index
    %16 = vector.load %arg6[%c2, %c0_20, %c0_21] : memref<9x8x32xbf16, #tpu.memory_space<vmem>>, vector<1x8x32xbf16>
    %17 = vector.shape_cast %16 : vector<1x8x32xbf16> to vector<8x32xbf16>
    %cst_22 = arith.constant dense<0.000000e+00> : vector<8x64xf32>
    %18 = tpu.matmul %17, %15, %cst_22 {dimension_numbers = #tpu.dot_dimension_numbers<[1], [1], [0], [0], [0, 0, 1, 0], [], []>} : vector<8x32xbf16>, vector<64x32xbf16>, vector<8x64xf32> -> vector<8x64xf32>
    %19 = arith.addf %12, %18 : vector<8x64xf32>
    %c0_23 = arith.constant 0 : index
    %c0_24 = arith.constant 0 : index
    %c0_25 = arith.constant 0 : index
    %c0_26 = arith.constant 0 : index
    %c0_27 = arith.constant 0 : index
    %20 = vector.load %arg4[%c0_23, %c0_24, %c0_25, %c0_26, %c0_27] : memref<1x1x9x9x32xbf16, #tpu.memory_space<vmem>>, vector<1x1x8x8x32xbf16>
    %21 = vector.shape_cast %20 : vector<1x1x8x8x32xbf16> to vector<8x8x32xbf16>
    %22 = vector.shape_cast %21 : vector<8x8x32xbf16> to vector<64x32xbf16>
    %c3 = arith.constant 3 : index
    %c0_28 = arith.constant 0 : index
    %c0_29 = arith.constant 0 : index
    %23 = vector.load %arg6[%c3, %c0_28, %c0_29] : memref<9x8x32xbf16, #tpu.memory_space<vmem>>, vector<1x8x32xbf16>
    %24 = vector.shape_cast %23 : vector<1x8x32xbf16> to vector<8x32xbf16>
    %cst_30 = arith.constant dense<0.000000e+00> : vector<8x64xf32>
    %25 = tpu.matmul %24, %22, %cst_30 {dimension_numbers = #tpu.dot_dimension_numbers<[1], [1], [0], [0], [0, 0, 1, 0], [], []>} : vector<8x32xbf16>, vector<64x32xbf16>, vector<8x64xf32> -> vector<8x64xf32>
    %26 = arith.addf %19, %25 : vector<8x64xf32>
    %c0_31 = arith.constant 0 : index
    %c0_32 = arith.constant 0 : index
    %c0_33 = arith.constant 0 : index
    %c0_34 = arith.constant 0 : index
    %c0_35 = arith.constant 0 : index
    %27 = vector.load %arg5[%c0_31, %c0_32, %c0_33, %c0_34, %c0_35] : memref<1x1x9x9x32xbf16, #tpu.memory_space<vmem>>, vector<1x1x8x8x32xbf16>
    %28 = vector.shape_cast %27 : vector<1x1x8x8x32xbf16> to vector<8x8x32xbf16>
    %29 = vector.shape_cast %28 : vector<8x8x32xbf16> to vector<64x32xbf16>
    %c4 = arith.constant 4 : index
    %c0_36 = arith.constant 0 : index
    %c0_37 = arith.constant 0 : index
    %30 = vector.load %arg6[%c4, %c0_36, %c0_37] : memref<9x8x32xbf16, #tpu.memory_space<vmem>>, vector<1x8x32xbf16>
    %31 = vector.shape_cast %30 : vector<1x8x32xbf16> to vector<8x32xbf16>
    %cst_38 = arith.constant dense<0.000000e+00> : vector<8x64xf32>
    %32 = tpu.matmul %31, %29, %cst_38 {dimension_numbers = #tpu.dot_dimension_numbers<[1], [1], [0], [0], [0, 0, 1, 0], [], []>} : vector<8x32xbf16>, vector<64x32xbf16>, vector<8x64xf32> -> vector<8x64xf32>
    %33 = arith.addf %26, %32 : vector<8x64xf32>
    %c0_39 = arith.constant 0 : index
    %c0_40 = arith.constant 0 : index
    %c0_41 = arith.constant 0 : index
    %c1_42 = arith.constant 1 : index
    %c0_43 = arith.constant 0 : index
    %34 = vector.load %arg4[%c0_39, %c0_40, %c0_41, %c1_42, %c0_43] : memref<1x1x9x9x32xbf16, #tpu.memory_space<vmem>>, vector<1x1x8x8x32xbf16>
    %35 = vector.shape_cast %34 : vector<1x1x8x8x32xbf16> to vector<8x8x32xbf16>
    %36 = vector.shape_cast %35 : vector<8x8x32xbf16> to vector<64x32xbf16>
    %c5 = arith.constant 5 : index
    %c0_44 = arith.constant 0 : index
    %c0_45 = arith.constant 0 : index
    %37 = vector.load %arg6[%c5, %c0_44, %c0_45] : memref<9x8x32xbf16, #tpu.memory_space<vmem>>, vector<1x8x32xbf16>
    %38 = vector.shape_cast %37 : vector<1x8x32xbf16> to vector<8x32xbf16>
    %cst_46 = arith.constant dense<0.000000e+00> : vector<8x64xf32>
    %39 = tpu.matmul %38, %36, %cst_46 {dimension_numbers = #tpu.dot_dimension_numbers<[1], [1], [0], [0], [0, 0, 1, 0], [], []>} : vector<8x32xbf16>, vector<64x32xbf16>, vector<8x64xf32> -> vector<8x64xf32>
    %40 = arith.addf %33, %39 : vector<8x64xf32>
    %c0_47 = arith.constant 0 : index
    %c0_48 = arith.constant 0 : index
    %c1_49 = arith.constant 1 : index
    %c0_50 = arith.constant 0 : index
    %c0_51 = arith.constant 0 : index
    %41 = vector.load %arg2[%c0_47, %c0_48, %c1_49, %c0_50, %c0_51] : memref<1x1x9x9x32xbf16, #tpu.memory_space<vmem>>, vector<1x1x8x8x32xbf16>
    %42 = vector.shape_cast %41 : vector<1x1x8x8x32xbf16> to vector<8x8x32xbf16>
    %43 = vector.shape_cast %42 : vector<8x8x32xbf16> to vector<64x32xbf16>
    %c6 = arith.constant 6 : index
    %c0_52 = arith.constant 0 : index
    %c0_53 = arith.constant 0 : index
    %44 = vector.load %arg6[%c6, %c0_52, %c0_53] : memref<9x8x32xbf16, #tpu.memory_space<vmem>>, vector<1x8x32xbf16>
    %45 = vector.shape_cast %44 : vector<1x8x32xbf16> to vector<8x32xbf16>
    %cst_54 = arith.constant dense<0.000000e+00> : vector<8x64xf32>
    %46 = tpu.matmul %45, %43, %cst_54 {dimension_numbers = #tpu.dot_dimension_numbers<[1], [1], [0], [0], [0, 0, 1, 0], [], []>} : vector<8x32xbf16>, vector<64x32xbf16>, vector<8x64xf32> -> vector<8x64xf32>
    %47 = arith.addf %40, %46 : vector<8x64xf32>
    %c0_55 = arith.constant 0 : index
    %c0_56 = arith.constant 0 : index
    %c1_57 = arith.constant 1 : index
    %c0_58 = arith.constant 0 : index
    %c0_59 = arith.constant 0 : index
    %48 = vector.load %arg3[%c0_55, %c0_56, %c1_57, %c0_58, %c0_59] : memref<1x1x9x9x32xbf16, #tpu.memory_space<vmem>>, vector<1x1x8x8x32xbf16>
    %49 = vector.shape_cast %48 : vector<1x1x8x8x32xbf16> to vector<8x8x32xbf16>
    %50 = vector.shape_cast %49 : vector<8x8x32xbf16> to vector<64x32xbf16>
    %c7 = arith.constant 7 : index
    %c0_60 = arith.constant 0 : index
    %c0_61 = arith.constant 0 : index
    %51 = vector.load %arg6[%c7, %c0_60, %c0_61] : memref<9x8x32xbf16, #tpu.memory_space<vmem>>, vector<1x8x32xbf16>
    %52 = vector.shape_cast %51 : vector<1x8x32xbf16> to vector<8x32xbf16>
    %cst_62 = arith.constant dense<0.000000e+00> : vector<8x64xf32>
    %53 = tpu.matmul %52, %50, %cst_62 {dimension_numbers = #tpu.dot_dimension_numbers<[1], [1], [0], [0], [0, 0, 1, 0], [], []>} : vector<8x32xbf16>, vector<64x32xbf16>, vector<8x64xf32> -> vector<8x64xf32>
    %54 = arith.addf %47, %53 : vector<8x64xf32>
    %c0_63 = arith.constant 0 : index
    %c0_64 = arith.constant 0 : index
    %c1_65 = arith.constant 1 : index
    %c1_66 = arith.constant 1 : index
    %c0_67 = arith.constant 0 : index
    %55 = vector.load %arg2[%c0_63, %c0_64, %c1_65, %c1_66, %c0_67] : memref<1x1x9x9x32xbf16, #tpu.memory_space<vmem>>, vector<1x1x8x8x32xbf16>
    %56 = vector.shape_cast %55 : vector<1x1x8x8x32xbf16> to vector<8x8x32xbf16>
    %57 = vector.shape_cast %56 : vector<8x8x32xbf16> to vector<64x32xbf16>
    %c8 = arith.constant 8 : index
    %c0_68 = arith.constant 0 : index
    %c0_69 = arith.constant 0 : index
    %58 = vector.load %arg6[%c8, %c0_68, %c0_69] : memref<9x8x32xbf16, #tpu.memory_space<vmem>>, vector<1x8x32xbf16>
    %59 = vector.shape_cast %58 : vector<1x8x32xbf16> to vector<8x32xbf16>
    %cst_70 = arith.constant dense<0.000000e+00> : vector<8x64xf32>
    %60 = tpu.matmul %59, %57, %cst_70 {dimension_numbers = #tpu.dot_dimension_numbers<[1], [1], [0], [0], [0, 0, 1, 0], [], []>} : vector<8x32xbf16>, vector<64x32xbf16>, vector<8x64xf32> -> vector<8x64xf32>
    %61 = arith.addf %54, %60 : vector<8x64xf32>
    %c0_71 = arith.constant 0 : index
    %c0_72 = arith.constant 0 : index
    %62 = vector.load %arg7[%c0_71, %c0_72] : memref<8x1xf32, #tpu.memory_space<vmem>>, vector<8x1xf32>
    %63 = vector.broadcast %62 : vector<8x1xf32> to vector<8x64xf32>
    %64 = arith.addf %61, %63 : vector<8x64xf32>
    %c0_73 = arith.constant 0 : index
    %c0_74 = arith.constant 0 : index
    %c0_75 = arith.constant 0 : index
    %c0_76 = arith.constant 0 : index
    %65 = vector.load %arg8[%c0_73, %c0_74, %c0_75, %c0_76] : memref<1x1x8x64xf32, #tpu.memory_space<vmem>>, vector<1x1x8x64xf32>
    %66 = vector.shape_cast %65 : vector<1x1x8x64xf32> to vector<8x64xf32>
    %67 = vector.shape_cast %64 : vector<8x64xf32> to vector<1x1x8x64xf32>
    tpu.vector_store %arg8[%c0_73, %c0_74, %c0_75, %c0_76], %67 {strides = array<i32>} : memref<1x1x8x64xf32, #tpu.memory_space<vmem>>, vector<1x1x8x64xf32>,
    return
  }
  func.func @transform_0(%arg0: i32, %arg1: i32) -> (i32, i32, i32, i32, i32) {
    %c0_i32 = arith.constant 0 : i32
    %c0_i32_0 = arith.constant 0 : i32
    %c0_i32_1 = arith.constant 0 : i32
    %c0_i32_2 = arith.constant 0 : i32
    return %arg0, %arg1, %c0_i32, %c0_i32_0, %c0_i32_1 : i32, i32, i32, i32, i32
  }
  func.func @transform_1(%arg0: i32, %arg1: i32) -> (i32, i32, i32, i32, i32) {
    %c0_i32 = arith.constant 0 : i32
    %c0_i32_0 = arith.constant 0 : i32
    %c0_i32_1 = arith.constant 0 : i32
    %c0_i32_2 = arith.constant 0 : i32
    return %arg0, %arg1, %c0_i32, %c0_i32_0, %c0_i32_1 : i32, i32, i32, i32, i32
  }
  func.func @transform_2(%arg0: i32, %arg1: i32) -> (i32, i32, i32, i32, i32) {
    %c0_i32 = arith.constant 0 : i32
    %c0_i32_0 = arith.constant 0 : i32
    %c0_i32_1 = arith.constant 0 : i32
    %c0_i32_2 = arith.constant 0 : i32
    return %arg0, %arg1, %c0_i32, %c0_i32_0, %c0_i32_1 : i32, i32, i32, i32, i32
  }
  func.func @transform_3(%arg0: i32, %arg1: i32) -> (i32, i32, i32, i32, i32) {
    %c0_i32 = arith.constant 0 : i32
    %c0_i32_0 = arith.constant 0 : i32
    %c0_i32_1 = arith.constant 0 : i32
    %c0_i32_2 = arith.constant 0 : i32
    return %arg0, %arg1, %c0_i32, %c0_i32_0, %c0_i32_1 : i32, i32, i32, i32, i32
  }
  func.func @transform_4(%arg0: i32, %arg1: i32) -> (i32, i32, i32) {
    %c0_i32 = arith.constant 0 : i32
    %c0_i32_0 = arith.constant 0 : i32
    %c0_i32_1 = arith.constant 0 : i32
    %c0_i32_2 = arith.constant 0 : i32
    return %c0_i32, %c0_i32_0, %c0_i32_1 : i32, i32, i32
  }
  func.func @transform_5(%arg0: i32, %arg1: i32) -> (i32, i32) {
    %c0_i32 = arith.constant 0 : i32
    %c0_i32_0 = arith.constant 0 : i32
    %c0_i32_1 = arith.constant 0 : i32
    return %c0_i32, %c0_i32_0 : i32, i32
  }
  func.func @transform_6(%arg0: i32, %arg1: i32) -> (i32, i32, i32, i32) {
    %c0_i32 = arith.constant 0 : i32
    %c0_i32_0 = arith.constant 0 : i32
    %c0_i32_1 = arith.constant 0 : i32
    return %arg0, %arg1, %c0_i32, %c0_i32_0 : i32, i32, i32, i32
  }
}

</mosaic_0001>

<llo_original>
// kernel: conv_delta_forward.1
$region0: #{conv_delta_forward.1}
  #allocation0 [shape = 'u32[]', space=smem, size = 0x4, offset = 0x4, fixed_abs, tag = 'smem constant byte address 0x4 - core index']
  #allocation1 [shape = 'u32[144,128]{1,0:T(1,128)}', space=vmem, size = 0x12000, scoped, tag = 'internal scratch']
  %s0 = inlined_call_operand.vmem [shape: bf16[2,1,9,9,32], index: 0, kind: input, shape index: {}]
  %s1 = inlined_call_operand.vmem [shape: bf16[2,1,9,9,32], index: 1, kind: input, shape index: {}]
  %s2 = inlined_call_operand.vmem [shape: bf16[2,1,9,9,32], index: 2, kind: input, shape index: {}]
  %s3 = inlined_call_operand.vmem [shape: bf16[2,1,9,9,32], index: 3, kind: input, shape index: {}]
  %s4 = inlined_call_operand.vmem [shape: bf16[9,8,32], index: 4, kind: input, shape index: {}]
  %s5 = inlined_call_operand.vmem [shape: f32[8,1], index: 5, kind: input, shape index: {}]
  %s6 = inlined_call_operand.vmem [shape: f32[2,1,8,64], index: 6, kind: output, shape index: {}]
  %s7 = sld [smem:[#allocation0]]
  $region57: #{conv_delta_forward.1} parent=0
    _
  %s9 = ssub.s32 1, %s7
  %s10 = scalar_select 0, %s9, %s7
  loop: start=0, step=1, limit=4
  $region2: #{conv_delta_forward.1} parent=0 // loop_pre_header
    _
  $region3: #{conv_delta_forward.1} parent=0 // loop_header
    %s12 = sphi 0, %s16
    %p13 = scmp.ge.s32.totalorder %s12, 4
    %s19 = sphi 0, %s31
    %s20 = sphi 0, %s27
    %s21 = sphi 0, %s19
    %s22 = sphi 0, %s20
    %s23 = sphi 0, %s21
    %s24 = sphi 0, %s22
    %s36 = sphi 0, %s38
    %s39 = sphi 0, %s36
    %s40 = sphi 0, %s39
    %s56 = sphi 0, %s40
    %s64 = sphi 0, %s66
    %s67 = sphi 0, %s64
    %s68 = sphi 0, %s67
    %s84 = sphi 0, %s68
    %s92 = sphi 0, %s94
    %s95 = sphi 0, %s92
    %s96 = sphi 0, %s95
    %s112 = sphi 0, %s96
    %s120 = sphi 0, %s122
    %s123 = sphi 0, %s120
    %s124 = sphi 0, %s123
    %s140 = sphi 0, %s124
    %s144 = sphi 0, %s144
    %s146 = sphi 0, %s144
    %s147 = sphi 0, %s146
    %s161 = sphi 0, %s147
    %s165 = sphi 0, %s165
    %s167 = sphi 0, %s165
    %s168 = sphi 0, %s167
    %s182 = sphi 0, %s168
    %s190 = sphi 0, %s192
    %s193 = sphi 0, %s190
    %s194 = sphi 0, %s193
    %s210 = sphi 0, %s194
  $region4: #{conv_delta_forward.1} parent=0 // loop_header_branch
    %15 = sbr.rel (%p13) target = $region8
  $region5: #{conv_delta_forward.1} parent=0 // loop_body
    %s17 = ssub.s32 %s12, 1
    %s18 = ssub.s32 %s12, 2
    %s25 = sadd.s32 1, %s20
    %p26 = scmp.ge.s32.totalorder %s25, 1
    %s27 = scalar_select %p26, 0, %s25
    %s28 = sadd.s32 1, %s19
    %s29 = scalar_select %p26, %s28, %s19
    %p30 = scmp.ge.s32.totalorder %s29, 2
    %s31 = scalar_select %p30, 0, %s29
    %s32 = ssub.s32 %s19, %s31
    %s33 = ssub.s32 %s20, %s27
    %s34 = sor.u32 %s32, %s33
    %p35 = scmp.eq.s32.totalorder %s34, 0
    %s37 = sadd.s32 %s36, 1
    %s38 = scalar_select %p35, %s36, %s37
    %p41 = pneg %p35
    %p42 = scmp.eq.s32.totalorder %s12, 1
    %p43 = por %p41, %p42
    %p44 = scmp.ne.s32.totalorder %s36, %s39
    %p45 = scmp.eq.s32.totalorder %s12, 0
    %p46 = por %p44, %p45
    %p47 = scmp.ne.s32.totalorder %s36, %s39
    %p48 = scmp.eq.s32.totalorder %s17, 1
    %p49 = por %p47, %p48
    %p50 = scmp.ne.s32.totalorder %s39, %s40
    %p51 = scmp.eq.s32.totalorder %s17, 0
    %p52 = por %p50, %p51
    %p53 = scmp.ne.s32.totalorder %s39, %s40
    %p54 = scmp.eq.s32.totalorder %s18, 1
    %p55 = por %p53, %p54
    %p57 = scmp.ne.s32.totalorder %s40, %s56
    %p58 = scmp.eq.s32.totalorder %s18, 0
    %p59 = por %p57, %p58
    %s60 = ssub.s32 %s19, %s31
    %s61 = ssub.s32 %s20, %s27
    %s62 = sor.u32 %s60, %s61
    %p63 = scmp.eq.s32.totalorder %s62, 0
    %s65 = sadd.s32 %s64, 1
    %s66 = scalar_select %p63, %s64, %s65
    %p69 = pneg %p63
    %p70 = scmp.eq.s32.totalorder %s12, 1
    %p71 = por %p69, %p70
    %p72 = scmp.ne.s32.totalorder %s64, %s67
    %p73 = scmp.eq.s32.totalorder %s12, 0
    %p74 = por %p72, %p73
    %p75 = scmp.ne.s32.totalorder %s64, %s67
    %p76 = scmp.eq.s32.totalorder %s17, 1
    %p77 = por %p75, %p76
    %p78 = scmp.ne.s32.totalorder %s67, %s68
    %p79 = scmp.eq.s32.totalorder %s17, 0
    %p80 = por %p78, %p79
    %p81 = scmp.ne.s32.totalorder %s67, %s68
    %p82 = scmp.eq.s32.totalorder %s18, 1
    %p83 = por %p81, %p82
    %p85 = scmp.ne.s32.totalorder %s68, %s84
    %p86 = scmp.eq.s32.totalorder %s18, 0
    %p87 = por %p85, %p86
    %s88 = ssub.s32 %s19, %s31
    %s89 = ssub.s32 %s20, %s27
    %s90 = sor.u32 %s88, %s89
    %p91 = scmp.eq.s32.totalorder %s90, 0
    %s93 = sadd.s32 %s92, 1
    %s94 = scalar_select %p91, %s92, %s93
    %p97 = pneg %p91
    %p98 = scmp.eq.s32.totalorder %s12, 1
    %p99 = por %p97, %p98
    %p100 = scmp.ne.s32.totalorder %s92, %s95
    %p101 = scmp.eq.s32.totalorder %s12, 0
    %p102 = por %p100, %p101
    %p103 = scmp.ne.s32.totalorder %s92, %s95
    %p104 = scmp.eq.s32.totalorder %s17, 1
    %p105 = por %p103, %p104
    %p106 = scmp.ne.s32.totalorder %s95, %s96
    %p107 = scmp.eq.s32.totalorder %s17, 0
    %p108 = por %p106, %p107
    %p109 = scmp.ne.s32.totalorder %s95, %s96
    %p110 = scmp.eq.s32.totalorder %s18, 1
    %p111 = por %p109, %p110
    %p113 = scmp.ne.s32.totalorder %s96, %s112
    %p114 = scmp.eq.s32.totalorder %s18, 0
    %p115 = por %p113, %p114
    %s116 = ssub.s32 %s19, %s31
    %s117 = ssub.s32 %s20, %s27
    %s118 = sor.u32 %s116, %s117
    %p119 = scmp.eq.s32.totalorder %s118, 0
    %s121 = sadd.s32 %s120, 1
    %s122 = scalar_select %p119, %s120, %s121
    %p125 = pneg %p119
    %p126 = scmp.eq.s32.totalorder %s12, 1
    %p127 = por %p125, %p126
    %p128 = scmp.ne.s32.totalorder %s120, %s123
    %p129 = scmp.eq.s32.totalorder %s12, 0
    %p130 = por %p128, %p129
    %p131 = scmp.ne.s32.totalorder %s120, %s123
    %p132 = scmp.eq.s32.totalorder %s17, 1
    %p133 = por %p131, %p132
    %p134 = scmp.ne.s32.totalorder %s123, %s124
    %p135 = scmp.eq.s32.totalorder %s17, 0
    %p136 = por %p134, %p135
    %p137 = scmp.ne.s32.totalorder %s123, %s124
    %p138 = scmp.eq.s32.totalorder %s18, 1
    %p139 = por %p137, %p138
    %p141 = scmp.ne.s32.totalorder %s124, %s140
    %p142 = scmp.eq.s32.totalorder %s18, 0
    %p143 = por %p141, %p142
    %s145 = sadd.s32 %s144, 1
    %p148 = scmp.eq.s32.totalorder %s12, 1
    %p149 = scmp.ne.s32.totalorder %s144, %s146
    %p150 = scmp.eq.s32.totalorder %s12, 0
    %p151 = por %p149, %p150
    %p152 = scmp.ne.s32.totalorder %s144, %s146
    %p153 = scmp.eq.s32.totalorder %s17, 1
    %p154 = por %p152, %p153
    %p155 = scmp.ne.s32.totalorder %s146, %s147
    %p156 = scmp.eq.s32.totalorder %s17, 0
    %p157 = por %p155, %p156
    %p158 = scmp.ne.s32.totalorder %s146, %s147
    %p159 = scmp.eq.s32.totalorder %s18, 1
    %p160 = por %p158, %p159
    %p162 = scmp.ne.s32.totalorder %s147, %s161
    %p163 = scmp.eq.s32.totalorder %s18, 0
    %p164 = por %p162, %p163
    %s166 = sadd.s32 %s165, 1
    %p169 = scmp.eq.s32.totalorder %s12, 1
    %p170 = scmp.ne.s32.totalorder %s165, %s167
    %p171 = scmp.eq.s32.totalorder %s12, 0
    %p172 = por %p170, %p171
    %p173 = scmp.ne.s32.totalorder %s165, %s167
    %p174 = scmp.eq.s32.totalorder %s17, 1
    %p175 = por %p173, %p174
    %p176 = scmp.ne.s32.totalorder %s167, %s168
    %p177 = scmp.eq.s32.totalorder %s17, 0
    %p178 = por %p176, %p177
    %p179 = scmp.ne.s32.totalorder %s167, %s168
    %p180 = scmp.eq.s32.totalorder %s18, 1
    %p181 = por %p179, %p180
    %p183 = scmp.ne.s32.totalorder %s168, %s182
    %p184 = scmp.eq.s32.totalorder %s18, 0
    %p185 = por %p183, %p184
    %s186 = ssub.s32 %s19, %s31
    %s187 = ssub.s32 %s20, %s27
    %s188 = sor.u32 %s186, %s187
    %p189 = scmp.eq.s32.totalorder %s188, 0
    %s191 = sadd.s32 %s190, 1
    %s192 = scalar_select %p189, %s190, %s191
    %p195 = pneg %p189
    %p196 = scmp.eq.s32.totalorder %s12, 1
    %p197 = por %p195, %p196
    %p198 = scmp.ne.s32.totalorder %s190, %s193
    %p199 = scmp.eq.s32.totalorder %s12, 0
    %p200 = por %p198, %p199
    %p201 = scmp.ne.s32.totalorder %s190, %s193
    %p202 = scmp.eq.s32.totalorder %s17, 1
    %p203 = por %p201, %p202
    %p204 = scmp.ne.s32.totalorder %s193, %s194
    %p205 = scmp.eq.s32.totalorder %s17, 0
    %p206 = por %p204, %p205
    %p207 = scmp.ne.s32.totalorder %s193, %s194
    %p208 = scmp.eq.s32.totalorder %s18, 1
    %p209 = por %p207, %p208
    %p211 = scmp.ne.s32.totalorder %s194, %s210
    %p212 = scmp.eq.s32.totalorder %s18, 0
    %p213 = por %p211, %p212
    %p214 = scmp.le.s32.totalorder 1, %s12
    %p215 = scmp.lt.s32.totalorder %s12, 3
    %p216 = pnand %p214, %p215
    %p217 = pneg %p216
    // Predicated region
    $region9: #{conv_delta_forward.1} parent=5 // pred_check
      _
    $region10: #{conv_delta_forward.1} parent=5 // pred_check_branch
      %219 = sbr.rel (%p216) target = $region12
    $region11: #{conv_delta_forward.1} parent=5 // pred_region
      %s220 = ssub.s32 %s12, 1
      // Predicated region
      $region13: #{conv_delta_forward.1} parent=11 // pred_check
        %p221 = pneg %p157
      $region14: #{conv_delta_forward.1} parent=11 // pred_check_branch
        %223 = sbr.rel (%p221) target = $region16
      $region15: #{conv_delta_forward.1} parent=11 // pred_region
        _
      $region16: #{conv_delta_forward.1} parent=11 // pred_fallthru
        _
      // Predicated region
      $region17: #{conv_delta_forward.1} parent=11 // pred_check
        %p224 = pneg %p178
      $region18: #{conv_delta_forward.1} parent=11 // pred_check_branch
        %226 = sbr.rel (%p224) target = $region20
      $region19: #{conv_delta_forward.1} parent=11 // pred_region
        _
      $region20: #{conv_delta_forward.1} parent=11 // pred_fallthru
        _
    $region12: #{conv_delta_forward.1} parent=5 // pred_fallthru
      _
    %p227 = scmp.lt.s32.totalorder %s12, 2
    // Predicated region
    $region21: #{conv_delta_forward.1} parent=5 // pred_check
      %p228 = pneg %p227
    $region22: #{conv_delta_forward.1} parent=5 // pred_check_branch
      %230 = sbr.rel (%p228) target = $region24
    $region23: #{conv_delta_forward.1} parent=5 // pred_region
      // Predicated region
      $region25: #{conv_delta_forward.1} parent=23 // pred_check
        %p231 = pneg %p46
      $region26: #{conv_delta_forward.1} parent=23 // pred_check_branch
        %233 = sbr.rel (%p231) target = $region28
      $region27: #{conv_delta_forward.1} parent=23 // pred_region
        %p234 = scmp.lt.s32.totalorder %s19, 1
        %s235 = scalar_select %p234, %s19, 1
        %p236 = scmp.lt.s32.totalorder %s20, 0
        %s237 = scalar_select %p236, %s20, 0
        %s238 = smul.addr %s237, 18
        %s239 = smul.addr %s235, 18
        %s240 = sadd.s32 %s238, %s239
        %s241 = smul.addr %s240, 4
        %s242 = scalar_lea.vmem %s0, %s241
      $region28: #{conv_delta_forward.1} parent=23 // pred_fallthru
        _
      // Predicated region
      $region29: #{conv_delta_forward.1} parent=23 // pred_check
        %p243 = pneg %p74
      $region30: #{conv_delta_forward.1} parent=23 // pred_check_branch
        %245 = sbr.rel (%p243) target = $region32
      $region31: #{conv_delta_forward.1} parent=23 // pred_region
        %p246 = scmp.lt.s32.totalorder %s19, 1
        %s247 = scalar_select %p246, %s19, 1
        %p248 = scmp.lt.s32.totalorder %s20, 0
        %s249 = scalar_select %p248, %s20, 0
        %s250 = smul.addr %s249, 18
        %s251 = smul.addr %s247, 18
        %s252 = sadd.s32 %s250, %s251
        %s253 = smul.addr %s252, 4
        %s254 = scalar_lea.vmem %s1, %s253
      $region32: #{conv_delta_forward.1} parent=23 // pred_fallthru
        _
      // Predicated region
      $region33: #{conv_delta_forward.1} parent=23 // pred_check
        %p255 = pneg %p102
      $region34: #{conv_delta_forward.1} parent=23 // pred_check_branch
        %257 = sbr.rel (%p255) target = $region36
      $region35: #{conv_delta_forward.1} parent=23 // pred_region
        %p258 = scmp.lt.s32.totalorder %s19, 1
        %s259 = scalar_select %p258, %s19, 1
        %p260 = scmp.lt.s32.totalorder %s20, 0
        %s261 = scalar_select %p260, %s20, 0
        %s262 = smul.addr %s261, 18
        %s263 = smul.addr %s259, 18
        %s264 = sadd.s32 %s262, %s263
        %s265 = smul.addr %s264, 4
        %s266 = scalar_lea.vmem %s2, %s265
      $region36: #{conv_delta_forward.1} parent=23 // pred_fallthru
        _
      // Predicated region
      $region37: #{conv_delta_forward.1} parent=23 // pred_check
        %p267 = pneg %p130
      $region38: #{conv_delta_forward.1} parent=23 // pred_check_branch
        %269 = sbr.rel (%p267) target = $region40
      $region39: #{conv_delta_forward.1} parent=23 // pred_region
        %p270 = scmp.lt.s32.totalorder %s19, 1
        %s271 = scalar_select %p270, %s19, 1
        %p272 = scmp.lt.s32.totalorder %s20, 0
        %s273 = scalar_select %p272, %s20, 0
        %s274 = smul.addr %s273, 18
        %s275 = smul.addr %s271, 18
        %s276 = sadd.s32 %s274, %s275
        %s277 = smul.addr %s276, 4
        %s278 = scalar_lea.vmem %s3, %s277
      $region40: #{conv_delta_forward.1} parent=23 // pred_fallthru
        _
    $region24: #{conv_delta_forward.1} parent=5 // pred_fallthru
      _
    %p279 = scmp.le.s32.totalorder 1, %s12
    %p280 = scmp.lt.s32.totalorder %s12, 3
    %p281 = pnand %p279, %p280
    %p282 = pneg %p281
    // Predicated region
    $region41: #{conv_delta_forward.1} parent=5 // pred_check
      _
    $region42: #{conv_delta_forward.1} parent=5 // pred_check_branch
      %284 = sbr.rel (%p281) target = $region44
    $region43: #{conv_delta_forward.1} parent=5 // pred_region
      %s285 = ssub.s32 %s12, 1
      %p286 = scmp.lt.s32.totalorder %s21, 1
      %s287 = scalar_select %p286, %s21, 1
      %p288 = scmp.lt.s32.totalorder %s22, 0
      %s289 = scalar_select %p288, %s22, 0
      %s290 = smul.addr %s289, 18
      %s291 = smul.addr %s287, 18
      %s292 = sadd.s32 %s290, %s291
      %s293 = smul.addr %s292, 4
      %s294 = scalar_lea.vmem %s0, %s293
      %p295 = pneg %p52
      %p296 = pneg %p49
      %p297 = scmp.lt.s32.totalorder %s21, 1
      %s298 = scalar_select %p297, %s21, 1
      %p299 = scmp.lt.s32.totalorder %s22, 0
      %s300 = scalar_select %p299, %s22, 0
      %s301 = smul.addr %s300, 18
      %s302 = smul.addr %s298, 18
      %s303 = sadd.s32 %s301, %s302
      %s304 = smul.addr %s303, 4
      %s305 = scalar_lea.vmem %s1, %s304
      %p306 = pneg %p80
      %p307 = pneg %p77
      %p308 = scmp.lt.s32.totalorder %s21, 1
      %s309 = scalar_select %p308, %s21, 1
      %p310 = scmp.lt.s32.totalorder %s22, 0
      %s311 = scalar_select %p310, %s22, 0
      %s312 = smul.addr %s311, 18
      %s313 = smul.addr %s309, 18
      %s314 = sadd.s32 %s312, %s313
      %s315 = smul.addr %s314, 4
      %s316 = scalar_lea.vmem %s2, %s315
      %p317 = pneg %p108
      %p318 = pneg %p105
      %p319 = scmp.lt.s32.totalorder %s21, 1
      %s320 = scalar_select %p319, %s21, 1
      %p321 = scmp.lt.s32.totalorder %s22, 0
      %s322 = scalar_select %p321, %s22, 0
      %s323 = smul.addr %s322, 18
      %s324 = smul.addr %s320, 18
      %s325 = sadd.s32 %s323, %s324
      %s326 = smul.addr %s325, 4
      %s327 = scalar_lea.vmem %s3, %s326
      %p328 = pneg %p136
      %p329 = pneg %p133
      %p330 = pneg %p157
      %p331 = pneg %p154
      %p332 = pneg %p178
      %p333 = pneg %p175
      %p334 = pneg %p206
      %p335 = pneg %p203
      %p336 = scmp.lt.s32.totalorder %s21, 1
      %s337 = scalar_select %p336, %s21, 1
      %p338 = scmp.lt.s32.totalorder %s22, 0
      %s339 = scalar_select %p338, %s22, 0
      %s340 = sadd.s32 %s339, %s337
      %s341 = smul.addr %s340, 8
      %s342 = scalar_lea.vmem %s6, %s341
      %p343 = scmp.lt.s32.totalorder %s21, 1
      %s344 = scalar_select %p343, %s21, 1
      %p345 = scmp.lt.s32.totalorder %s22, 0
      %s346 = scalar_select %p345, %s22, 0
      %s347 = smul.addr %s346, 18
      %s348 = smul.addr %s344, 18
      %s349 = sadd.s32 %s347, %s348
      %s350 = smul.addr %s349, 4
      %s351 = scalar_lea.vmem %s0, %s350
      %p352 = scmp.lt.s32.totalorder %s21, 1
      %s353 = scalar_select %p352, %s21, 1
      %p354 = scmp.lt.s32.totalorder %s22, 0
      %s355 = scalar_select %p354, %s22, 0
      %s356 = smul.addr %s355, 18
      %s357 = smul.addr %s353, 18
      %s358 = sadd.s32 %s356, %s357
      %s359 = smul.addr %s358, 4
      %s360 = scalar_lea.vmem %s1, %s359
      %p361 = scmp.lt.s32.totalorder %s21, 1
      %s362 = scalar_select %p361, %s21, 1
      %p363 = scmp.lt.s32.totalorder %s22, 0
      %s364 = scalar_select %p363, %s22, 0
      %s365 = smul.addr %s364, 18
      %s366 = smul.addr %s362, 18
      %s367 = sadd.s32 %s365, %s366
      %s368 = smul.addr %s367, 4
      %s369 = scalar_lea.vmem %s2, %s368
      %p370 = scmp.lt.s32.totalorder %s21, 1
      %s371 = scalar_select %p370, %s21, 1
      %p372 = scmp.lt.s32.totalorder %s22, 0
      %s373 = scalar_select %p372, %s22, 0
      %s374 = smul.addr %s373, 18
      %s375 = smul.addr %s371, 18
      %s376 = sadd.s32 %s374, %s375
      %s377 = smul.addr %s376, 4
      %s378 = scalar_lea.vmem %s3, %s377
      %p379 = scmp.lt.s32.totalorder %s21, 1
      %s380 = scalar_select %p379, %s21, 1
      %p381 = scmp.lt.s32.totalorder %s22, 0
      %s382 = scalar_select %p381, %s22, 0
      %s383 = sadd.s32 %s382, %s380
      %s384 = smul.addr %s383, 8
      %s385 = scalar_lea.vmem %s6, %s384
      %v387 = vld [vmem:[%s351] sm:$0xf]
      %v388 = vld [vmem:[%s351 + $0x8] sm:$0xf]
      %v389 = vld [vmem:[%s351 + $0x10] sm:$0xf]
      %v390 = vld [vmem:[%s351 + $0x18] sm:$0xf]
      %v391 = vld [vmem:[%s351 + $0x20] sm:$0xf]
      %v392 = vld [vmem:[%s351 + $0x28] sm:$0xf]
      %v393 = vld [vmem:[%s351 + $0x30] sm:$0xf]
      %v394 = vld [vmem:[%s351 + $0x38] sm:$0xf]
      %v395 = vld [vmem:[%s4] sm:$0xf]
      %v396 = vld [vmem:[%s360] sm:$0xf]
      %v397 = vld [vmem:[%s360 + $0x8] sm:$0xf]
      %v398 = vld [vmem:[%s360 + $0x10] sm:$0xf]
      %v399 = vld [vmem:[%s360 + $0x18] sm:$0xf]
      %v400 = vld [vmem:[%s360 + $0x20] sm:$0xf]
      %v401 = vld [vmem:[%s360 + $0x28] sm:$0xf]
      %v402 = vld [vmem:[%s360 + $0x30] sm:$0xf]
      %v403 = vld [vmem:[%s360 + $0x38] sm:$0xf]
      %s404 = scalar_lea.vmem %s4, 4
      %v405 = vld [vmem:[%s404] sm:$0xf]
      %v414 = vunpack.c.l.b16 %v396
      %v415 = vunpack.c.l.b16 %v397
      %v416 = vunpack.c.l.b16 %v398
      %v417 = vunpack.c.l.b16 %v399
      %v418 = vunpack.c.l.b16 %v400
      %v419 = vunpack.c.l.b16 %v401
      %v420 = vunpack.c.l.b16 %v402
      %v421 = vunpack.c.l.b16 %v403
      %v422 = vpack.c.b16 %v415, %v414
      %v423 = vpack.c.b16 %v417, %v416
      %v424 = vpack.c.b16 %v419, %v418
      %v425 = vpack.c.b16 %v421, %v420
      %vm426 = vcmask 261120
      %v428 = vsel %vm426, %v405, 0
      %v431 = vsel %vm426, %v422, 0
      %v434 = vsel %vm426, %v423, 0
      %v437 = vsel %vm426, %v424, 0
      %v440 = vsel %vm426, %v425, 0
      %442 = vmatprep.subr.bf16.mxu0 0
      %443 = vmatpush1.bf16.xpose.msra.mxu0 %v431
      %444 = vmatprep.subr.bf16.mxu0 0
      %445 = vmatpush1.bf16.xpose.msra.mxu0 %v434
      %446 = vmatprep.subr.bf16.mxu0 0
      %447 = vmatpush1.bf16.xpose.msra.mxu0 %v437
      %448 = vmatprep.subr.bf16.mxu0 0
      %449 = vmatpush1.bf16.xpose.msra.mxu0 %v440
      %450 = vmatprep.subr.bf16.mxu0 0
      %451 = vmatpush1.bf16.xpose.msra.mxu0 0
      %452 = vmatprep.subr.bf16.mxu0 0
      %453 = vmatpush1.bf16.xpose.msra.mxu0 0
      %454 = vmatprep.subr.bf16.mxu0 0
      %455 = vmatpush1.bf16.xpose.msra.mxu0 0
      %456 = vmatprep.subr.bf16.mxu0 0
      %457 = vmatpush1.bf16.xpose.msra.mxu0 0
      %458 = vmatprep.subr.bf16.mxu0 0
      %459 = vmatpush1.bf16.xpose.msra.mxu0 0
      %460 = vmatprep.subr.bf16.mxu0 0
      %461 = vmatpush1.bf16.xpose.msra.mxu0 0
      %462 = vmatprep.subr.bf16.mxu0 0
      %463 = vmatpush1.bf16.xpose.msra.mxu0 0
      %464 = vmatprep.subr.bf16.mxu0 0
      %465 = vmatpush1.bf16.xpose.msra.mxu0 0
      %466 = vmatprep.subr.bf16.mxu0 0
      %467 = vmatpush1.bf16.xpose.msra.mxu0 0
      %468 = vmatprep.subr.bf16.mxu0 0
      %469 = vmatpush1.bf16.xpose.msra.mxu0 0
      %470 = vmatprep.subr.bf16.mxu0 0
      %471 = vmatpush1.bf16.xpose.msra.mxu0 0
      %472 = vmatprep.subr.bf16.mxu0 0
      %473 = vmatpush1.bf16.xpose.msra.mxu0 0
      %474 = vmatprep.mubr.bf16.mxu0 0
      %475 = vmatmul.mubr.bf16.gmra.mrb[0].mxu0 %v428
      %v476 = vpop.f32.mrb[0].mxu0
      %v477 = vadd.f32 0.0, %v476
      %v478 = vpop.f32.mrb[0].mxu0
      %v479 = vpop.f32.mrb[0].mxu0
      %v480 = vpop.f32.mrb[0].mxu0
      %481 = vdwg.mxu0
      %v490 = vunpack.c.l.b16 %v387
      %v491 = vunpack.c.l.b16 %v388
      %v492 = vunpack.c.l.b16 %v389
      %v493 = vunpack.c.l.b16 %v390
      %v494 = vunpack.c.l.b16 %v391
      %v495 = vunpack.c.l.b16 %v392
      %v496 = vunpack.c.l.b16 %v393
      %v497 = vunpack.c.l.b16 %v394
      %v498 = vpack.c.b16 %v491, %v490
      %v499 = vpack.c.b16 %v493, %v492
      %v500 = vpack.c.b16 %v495, %v494
      %v501 = vpack.c.b16 %v497, %v496
      %v503 = vsel %vm426, %v395, 0
      %v506 = vsel %vm426, %v498, 0
      %v509 = vsel %vm426, %v499, 0
      %v512 = vsel %vm426, %v500, 0
      %v515 = vsel %vm426, %v501, 0
      %517 = vmatprep.subr.bf16.mxu0 0
      %518 = vmatpush1.bf16.xpose.msra.mxu0 %v506
      %519 = vmatprep.subr.bf16.mxu0 0
      %520 = vmatpush1.bf16.xpose.msra.mxu0 %v509
      %521 = vmatprep.subr.bf16.mxu0 0
      %522 = vmatpush1.bf16.xpose.msra.mxu0 %v512
      %523 = vmatprep.subr.bf16.mxu0 0
      %524 = vmatpush1.bf16.xpose.msra.mxu0 %v515
      %525 = vmatprep.subr.bf16.mxu0 0
      %526 = vmatpush1.bf16.xpose.msra.mxu0 0
      %527 = vmatprep.subr.bf16.mxu0 0
      %528 = vmatpush1.bf16.xpose.msra.mxu0 0
      %529 = vmatprep.subr.bf16.mxu0 0
      %530 = vmatpush1.bf16.xpose.msra.mxu0 0
      %531 = vmatprep.subr.bf16.mxu0 0
      %532 = vmatpush1.bf16.xpose.msra.mxu0 0
      %533 = vmatprep.subr.bf16.mxu0 0
      %534 = vmatpush1.bf16.xpose.msra.mxu0 0
      %535 = vmatprep.subr.bf16.mxu0 0
      %536 = vmatpush1.bf16.xpose.msra.mxu0 0
      %537 = vmatprep.subr.bf16.mxu0 0
      %538 = vmatpush1.bf16.xpose.msra.mxu0 0
      %539 = vmatprep.subr.bf16.mxu0 0
      %540 = vmatpush1.bf16.xpose.msra.mxu0 0
      %541 = vmatprep.subr.bf16.mxu0 0
      %542 = vmatpush1.bf16.xpose.msra.mxu0 0
      %543 = vmatprep.subr.bf16.mxu0 0
      %544 = vmatpush1.bf16.xpose.msra.mxu0 0
      %545 = vmatprep.subr.bf16.mxu0 0
      %546 = vmatpush1.bf16.xpose.msra.mxu0 0
      %547 = vmatprep.subr.bf16.mxu0 0
      %548 = vmatpush1.bf16.xpose.msra.mxu0 0
      %549 = vmatprep.mubr.bf16.mxu0 0
      %550 = vmatmul.mubr.bf16.gmra.mrb[0].mxu0 %v503
      %v551 = vpop.f32.mrb[0].mxu0
      %v552 = vadd.f32 %v477, %v551
      %v553 = vpop.f32.mrb[0].mxu0
      %v554 = vpop.f32.mrb[0].mxu0
      %v555 = vpop.f32.mrb[0].mxu0
      %556 = vdwg.mxu0
      %v557 = vld [vmem:[%s351] sm:$0xf]
      %v558 = vld [vmem:[%s351 + $0x4] sm:$0x1]
      %v559 = vld [vmem:[%s351 + $0x8] sm:$0xf]
      %v560 = vld [vmem:[%s351 + $0xc] sm:$0x1]
      %v561 = vld [vmem:[%s351 + $0x10] sm:$0xf]
      %v562 = vld [vmem:[%s351 + $0x14] sm:$0x1]
      %v563 = vld [vmem:[%s351 + $0x18] sm:$0xf]
      %v564 = vld [vmem:[%s351 + $0x1c] sm:$0x1]
      %v565 = vld [vmem:[%s351 + $0x20] sm:$0xf]
      %v566 = vld [vmem:[%s351 + $0x24] sm:$0x1]
      %v567 = vld [vmem:[%s351 + $0x28] sm:$0xf]
      %v568 = vld [vmem:[%s351 + $0x2c] sm:$0x1]
      %v569 = vld [vmem:[%s351 + $0x30] sm:$0xf]
      %v570 = vld [vmem:[%s351 + $0x34] sm:$0x1]
      %v571 = vld [vmem:[%s351 + $0x38] sm:$0xf]
      %v572 = vld [vmem:[%s351 + $0x3c] sm:$0x1]
      %vm573 = vsmask.f32 3328
      %vm574 = vsmask.f32 7440
      %vm575 = vmor %vm573, %vm574
      %v577 = vshrl.u32 %v557, 16
      %v579 = vrot.slane %v577, 4
      %v580 = vshll.u32 %v557, 16
      %v582 = vrot.slane %v580, 5
      %v583 = vor.u32 %v579, %v582
      %v584 = vrot.slane %v583, 4
      %v586 = vshll.u32 %v558, 16
      %v588 = vrot.slane %v586, 5
      %v589 = vsel %vm575, %v584, %v588
      %v591 = vshrl.u32 %v559, 16
      %v593 = vrot.slane %v591, 4
      %v594 = vshll.u32 %v559, 16
      %v596 = vrot.slane %v594, 5
      %v597 = vor.u32 %v593, %v596
      %v598 = vrot.slane %v597, 4
      %v600 = vshll.u32 %v560, 16
      %v602 = vrot.slane %v600, 5
      %v603 = vsel %vm575, %v598, %v602
      %v605 = vshrl.u32 %v561, 16
      %v607 = vrot.slane %v605, 4
      %v608 = vshll.u32 %v561, 16
      %v610 = vrot.slane %v608, 5
      %v611 = vor.u32 %v607, %v610
      %v612 = vrot.slane %v611, 4
      %v614 = vshll.u32 %v562, 16
      %v616 = vrot.slane %v614, 5
      %v617 = vsel %vm575, %v612, %v616
      %v619 = vshrl.u32 %v563, 16
      %v621 = vrot.slane %v619, 4
      %v622 = vshll.u32 %v563, 16
      %v624 = vrot.slane %v622, 5
      %v625 = vor.u32 %v621, %v624
      %v626 = vrot.slane %v625, 4
      %v628 = vshll.u32 %v564, 16
      %v630 = vrot.slane %v628, 5
      %v631 = vsel %vm575, %v626, %v630
      %v633 = vshrl.u32 %v565, 16
      %v635 = vrot.slane %v633, 4
      %v636 = vshll.u32 %v565, 16
      %v638 = vrot.slane %v636, 5
      %v639 = vor.u32 %v635, %v638
      %v640 = vrot.slane %v639, 4
      %v642 = vshll.u32 %v566, 16
      %v644 = vrot.slane %v642, 5
      %v645 = vsel %vm575, %v640, %v644
      %v647 = vshrl.u32 %v567, 16
      %v649 = vrot.slane %v647, 4
      %v650 = vshll.u32 %v567, 16
      %v652 = vrot.slane %v650, 5
      %v653 = vor.u32 %v649, %v652
      %v654 = vrot.slane %v653, 4
      %v656 = vshll.u32 %v568, 16
      %v658 = vrot.slane %v656, 5
      %v659 = vsel %vm575, %v654, %v658
      %v661 = vshrl.u32 %v569, 16
      %v663 = vrot.slane %v661, 4
      %v664 = vshll.u32 %v569, 16
      %v666 = vrot.slane %v664, 5
      %v667 = vor.u32 %v663, %v666
      %v668 = vrot.slane %v667, 4
      %v670 = vshll.u32 %v570, 16
      %v672 = vrot.slane %v670, 5
      %v673 = vsel %vm575, %v668, %v672
      %v675 = vshrl.u32 %v571, 16
      %v677 = vrot.slane %v675, 4
      %v678 = vshll.u32 %v571, 16
      %v680 = vrot.slane %v678, 5
      %v681 = vor.u32 %v677, %v680
      %v682 = vrot.slane %v681, 4
      %v684 = vshll.u32 %v572, 16
      %v686 = vrot.slane %v684, 5
      %v687 = vsel %vm575, %v682, %v686
      %s688 = scalar_lea.vmem %s4, 8
      %v689 = vld [vmem:[%s688] sm:$0xf]
      %v690 = vunpack.c.l.b16 %v589
      %v691 = vunpack.c.l.b16 %v603
      %v692 = vunpack.c.l.b16 %v617
      %v693 = vunpack.c.l.b16 %v631
      %v694 = vunpack.c.l.b16 %v645
      %v695 = vunpack.c.l.b16 %v659
      %v696 = vunpack.c.l.b16 %v673
      %v697 = vunpack.c.l.b16 %v687
      %v698 = vpack.c.b16 %v691, %v690
      %v699 = vpack.c.b16 %v693, %v692
      %v700 = vpack.c.b16 %v695, %v694
      %v701 = vpack.c.b16 %v697, %v696
      %v703 = vsel %vm426, %v689, 0
      %v706 = vsel %vm426, %v698, 0
      %v709 = vsel %vm426, %v699, 0
      %v712 = vsel %vm426, %v700, 0
      %v715 = vsel %vm426, %v701, 0
      %717 = vmatprep.subr.bf16.mxu0 0
      %718 = vmatpush1.bf16.xpose.msra.mxu0 %v706
      %719 = vmatprep.subr.bf16.mxu0 0
      %720 = vmatpush1.bf16.xpose.msra.mxu0 %v709
      %721 = vmatprep.subr.bf16.mxu0 0
      %722 = vmatpush1.bf16.xpose.msra.mxu0 %v712
      %723 = vmatprep.subr.bf16.mxu0 0
      %724 = vmatpush1.bf16.xpose.msra.mxu0 %v715
      %725 = vmatprep.subr.bf16.mxu0 0
      %726 = vmatpush1.bf16.xpose.msra.mxu0 0
      %727 = vmatprep.subr.bf16.mxu0 0
      %728 = vmatpush1.bf16.xpose.msra.mxu0 0
      %729 = vmatprep.subr.bf16.mxu0 0
      %730 = vmatpush1.bf16.xpose.msra.mxu0 0
      %731 = vmatprep.subr.bf16.mxu0 0
      %732 = vmatpush1.bf16.xpose.msra.mxu0 0
      %733 = vmatprep.subr.bf16.mxu0 0
      %734 = vmatpush1.bf16.xpose.msra.mxu0 0
      %735 = vmatprep.subr.bf16.mxu0 0
      %736 = vmatpush1.bf16.xpose.msra.mxu0 0
      %737 = vmatprep.subr.bf16.mxu0 0
      %738 = vmatpush1.bf16.xpose.msra.mxu0 0
      %739 = vmatprep.subr.bf16.mxu0 0
      %740 = vmatpush1.bf16.xpose.msra.mxu0 0
      %741 = vmatprep.subr.bf16.mxu0 0
      %742 = vmatpush1.bf16.xpose.msra.mxu0 0
      %743 = vmatprep.subr.bf16.mxu0 0
      %744 = vmatpush1.bf16.xpose.msra.mxu0 0
      %745 = vmatprep.subr.bf16.mxu0 0
      %746 = vmatpush1.bf16.xpose.msra.mxu0 0
      %747 = vmatprep.subr.bf16.mxu0 0
      %748 = vmatpush1.bf16.xpose.msra.mxu0 0
      %749 = vmatprep.mubr.bf16.mxu0 0
      %750 = vmatmul.mubr.bf16.gmra.mrb[0].mxu0 %v703
      %v751 = vpop.f32.mrb[0].mxu0
      %v752 = vadd.f32 0.0, %v751
      %v753 = vpop.f32.mrb[0].mxu0
      %v754 = vpop.f32.mrb[0].mxu0
      %v755 = vpop.f32.mrb[0].mxu0
      %756 = vdwg.mxu0
      %v757 = vadd.f32 %v552, %v752
      %v758 = vld [vmem:[%s369] sm:$0xf]
      %v759 = vld [vmem:[%s369 + $0x8] sm:$0xf]
      %v760 = vld [vmem:[%s369 + $0x10] sm:$0xf]
      %v761 = vld [vmem:[%s369 + $0x18] sm:$0xf]
      %v762 = vld [vmem:[%s369 + $0x20] sm:$0xf]
      %v763 = vld [vmem:[%s369 + $0x28] sm:$0xf]
      %v764 = vld [vmem:[%s369 + $0x30] sm:$0xf]
      %v765 = vld [vmem:[%s369 + $0x38] sm:$0xf]
      %s766 = scalar_lea.vmem %s4, 12
      %v767 = vld [vmem:[%s766] sm:$0xf]
      %v776 = vunpack.c.l.b16 %v758
      %v777 = vunpack.c.l.b16 %v759
      %v778 = vunpack.c.l.b16 %v760
      %v779 = vunpack.c.l.b16 %v761
      %v780 = vunpack.c.l.b16 %v762
      %v781 = vunpack.c.l.b16 %v763
      %v782 = vunpack.c.l.b16 %v764
      %v783 = vunpack.c.l.b16 %v765
      %v784 = vpack.c.b16 %v777, %v776
      %v785 = vpack.c.b16 %v779, %v778
      %v786 = vpack.c.b16 %v781, %v780
      %v787 = vpack.c.b16 %v783, %v782
      %v789 = vsel %vm426, %v767, 0
      %v792 = vsel %vm426, %v784, 0
      %v795 = vsel %vm426, %v785, 0
      %v798 = vsel %vm426, %v786, 0
      %v801 = vsel %vm426, %v787, 0
      %803 = vmatprep.subr.bf16.mxu0 0
      %804 = vmatpush1.bf16.xpose.msra.mxu0 %v792
      %805 = vmatprep.subr.bf16.mxu0 0
      %806 = vmatpush1.bf16.xpose.msra.mxu0 %v795
      %807 = vmatprep.subr.bf16.mxu0 0
      %808 = vmatpush1.bf16.xpose.msra.mxu0 %v798
      %809 = vmatprep.subr.bf16.mxu0 0
      %810 = vmatpush1.bf16.xpose.msra.mxu0 %v801
      %811 = vmatprep.subr.bf16.mxu0 0
      %812 = vmatpush1.bf16.xpose.msra.mxu0 0
      %813 = vmatprep.subr.bf16.mxu0 0
      %814 = vmatpush1.bf16.xpose.msra.mxu0 0
      %815 = vmatprep.subr.bf16.mxu0 0
      %816 = vmatpush1.bf16.xpose.msra.mxu0 0
      %817 = vmatprep.subr.bf16.mxu0 0
      %818 = vmatpush1.bf16.xpose.msra.mxu0 0
      %819 = vmatprep.subr.bf16.mxu0 0
      %820 = vmatpush1.bf16.xpose.msra.mxu0 0
      %821 = vmatprep.subr.bf16.mxu0 0
      %822 = vmatpush1.bf16.xpose.msra.mxu0 0
      %823 = vmatprep.subr.bf16.mxu0 0
      %824 = vmatpush1.bf16.xpose.msra.mxu0 0
      %825 = vmatprep.subr.bf16.mxu0 0
      %826 = vmatpush1.bf16.xpose.msra.mxu0 0
      %827 = vmatprep.subr.bf16.mxu0 0
      %828 = vmatpush1.bf16.xpose.msra.mxu0 0
      %829 = vmatprep.subr.bf16.mxu0 0
      %830 = vmatpush1.bf16.xpose.msra.mxu0 0
      %831 = vmatprep.subr.bf16.mxu0 0
      %832 = vmatpush1.bf16.xpose.msra.mxu0 0
      %833 = vmatprep.subr.bf16.mxu0 0
      %834 = vmatpush1.bf16.xpose.msra.mxu0 0
      %835 = vmatprep.mubr.bf16.mxu0 0
      %836 = vmatmul.mubr.bf16.gmra.mrb[0].mxu0 %v789
      %v837 = vpop.f32.mrb[0].mxu0
      %v838 = vadd.f32 0.0, %v837
      %v839 = vpop.f32.mrb[0].mxu0
      %v840 = vpop.f32.mrb[0].mxu0
      %v841 = vpop.f32.mrb[0].mxu0
      %842 = vdwg.mxu0
      %v843 = vadd.f32 %v757, %v838
      %v844 = vld [vmem:[%s378] sm:$0xf]
      %v845 = vld [vmem:[%s378 + $0x8] sm:$0xf]
      %v846 = vld [vmem:[%s378 + $0x10] sm:$0xf]
      %v847 = vld [vmem:[%s378 + $0x18] sm:$0xf]
      %v848 = vld [vmem:[%s378 + $0x20] sm:$0xf]
      %v849 = vld [vmem:[%s378 + $0x28] sm:$0xf]
      %v850 = vld [vmem:[%s378 + $0x30] sm:$0xf]
      %v851 = vld [vmem:[%s378 + $0x38] sm:$0xf]
      %s852 = scalar_lea.vmem %s4, 16
      %v853 = vld [vmem:[%s852] sm:$0xf]
      %v862 = vunpack.c.l.b16 %v844
      %v863 = vunpack.c.l.b16 %v845
      %v864 = vunpack.c.l.b16 %v846
      %v865 = vunpack.c.l.b16 %v847
      %v866 = vunpack.c.l.b16 %v848
      %v867 = vunpack.c.l.b16 %v849
      %v868 = vunpack.c.l.b16 %v850
      %v869 = vunpack.c.l.b16 %v851
      %v870 = vpack.c.b16 %v863, %v862
      %v871 = vpack.c.b16 %v865, %v864
      %v872 = vpack.c.b16 %v867, %v866
      %v873 = vpack.c.b16 %v869, %v868
      %v875 = vsel %vm426, %v853, 0
      %v878 = vsel %vm426, %v870, 0
      %v881 = vsel %vm426, %v871, 0
      %v884 = vsel %vm426, %v872, 0
      %v887 = vsel %vm426, %v873, 0
      %889 = vmatprep.subr.bf16.mxu0 0
      %890 = vmatpush1.bf16.xpose.msra.mxu0 %v878
      %891 = vmatprep.subr.bf16.mxu0 0
      %892 = vmatpush1.bf16.xpose.msra.mxu0 %v881
      %893 = vmatprep.subr.bf16.mxu0 0
      %894 = vmatpush1.bf16.xpose.msra.mxu0 %v884
      %895 = vmatprep.subr.bf16.mxu0 0
      %896 = vmatpush1.bf16.xpose.msra.mxu0 %v887
      %897 = vmatprep.subr.bf16.mxu0 0
      %898 = vmatpush1.bf16.xpose.msra.mxu0 0
      %899 = vmatprep.subr.bf16.mxu0 0
      %900 = vmatpush1.bf16.xpose.msra.mxu0 0
      %901 = vmatprep.subr.bf16.mxu0 0
      %902 = vmatpush1.bf16.xpose.msra.mxu0 0
      %903 = vmatprep.subr.bf16.mxu0 0
      %904 = vmatpush1.bf16.xpose.msra.mxu0 0
      %905 = vmatprep.subr.bf16.mxu0 0
      %906 = vmatpush1.bf16.xpose.msra.mxu0 0
      %907 = vmatprep.subr.bf16.mxu0 0
      %908 = vmatpush1.bf16.xpose.msra.mxu0 0
      %909 = vmatprep.subr.bf16.mxu0 0
      %910 = vmatpush1.bf16.xpose.msra.mxu0 0
      %911 = vmatprep.subr.bf16.mxu0 0
      %912 = vmatpush1.bf16.xpose.msra.mxu0 0
      %913 = vmatprep.subr.bf16.mxu0 0
      %914 = vmatpush1.bf16.xpose.msra.mxu0 0
      %915 = vmatprep.subr.bf16.mxu0 0
      %916 = vmatpush1.bf16.xpose.msra.mxu0 0
      %917 = vmatprep.subr.bf16.mxu0 0
      %918 = vmatpush1.bf16.xpose.msra.mxu0 0
      %919 = vmatprep.subr.bf16.mxu0 0
      %920 = vmatpush1.bf16.xpose.msra.mxu0 0
      %921 = vmatprep.mubr.bf16.mxu0 0
      %922 = vmatmul.mubr.bf16.gmra.mrb[0].mxu0 %v875
      %v923 = vpop.f32.mrb[0].mxu0
      %v924 = vadd.f32 0.0, %v923
      %v925 = vpop.f32.mrb[0].mxu0
      %v926 = vpop.f32.mrb[0].mxu0
      %v927 = vpop.f32.mrb[0].mxu0
      %928 = vdwg.mxu0
      %v929 = vadd.f32 %v843, %v924
      %v930 = vld [vmem:[%s369] sm:$0xf]
      %v931 = vld [vmem:[%s369 + $0x4] sm:$0x1]
      %v932 = vld [vmem:[%s369 + $0x8] sm:$0xf]
      %v933 = vld [vmem:[%s369 + $0xc] sm:$0x1]
      %v934 = vld [vmem:[%s369 + $0x10] sm:$0xf]
      %v935 = vld [vmem:[%s369 + $0x14] sm:$0x1]
      %v936 = vld [vmem:[%s369 + $0x18] sm:$0xf]
      %v937 = vld [vmem:[%s369 + $0x1c] sm:$0x1]
      %v938 = vld [vmem:[%s369 + $0x20] sm:$0xf]
      %v939 = vld [vmem:[%s369 + $0x24] sm:$0x1]
      %v940 = vld [vmem:[%s369 + $0x28] sm:$0xf]
      %v941 = vld [vmem:[%s369 + $0x2c] sm:$0x1]
      %v942 = vld [vmem:[%s369 + $0x30] sm:$0xf]
      %v943 = vld [vmem:[%s369 + $0x34] sm:$0x1]
      %v944 = vld [vmem:[%s369 + $0x38] sm:$0xf]
      %v945 = vld [vmem:[%s369 + $0x3c] sm:$0x1]
      %v947 = vshrl.u32 %v930, 16
      %v949 = vrot.slane %v947, 4
      %v950 = vshll.u32 %v930, 16
      %v952 = vrot.slane %v950, 5
      %v953 = vor.u32 %v949, %v952
      %v954 = vrot.slane %v953, 4
      %v956 = vshll.u32 %v931, 16
      %v958 = vrot.slane %v956, 5
      %v959 = vsel %vm575, %v954, %v958
      %v961 = vshrl.u32 %v932, 16
      %v963 = vrot.slane %v961, 4
      %v964 = vshll.u32 %v932, 16
      %v966 = vrot.slane %v964, 5
      %v967 = vor.u32 %v963, %v966
      %v968 = vrot.slane %v967, 4
      %v970 = vshll.u32 %v933, 16
      %v972 = vrot.slane %v970, 5
      %v973 = vsel %vm575, %v968, %v972
      %v975 = vshrl.u32 %v934, 16
      %v977 = vrot.slane %v975, 4
      %v978 = vshll.u32 %v934, 16
      %v980 = vrot.slane %v978, 5
      %v981 = vor.u32 %v977, %v980
      %v982 = vrot.slane %v981, 4
      %v984 = vshll.u32 %v935, 16
      %v986 = vrot.slane %v984, 5
      %v987 = vsel %vm575, %v982, %v986
      %v989 = vshrl.u32 %v936, 16
      %v991 = vrot.slane %v989, 4
      %v992 = vshll.u32 %v936, 16
      %v994 = vrot.slane %v992, 5
      %v995 = vor.u32 %v991, %v994
      %v996 = vrot.slane %v995, 4
      %v998 = vshll.u32 %v937, 16
      %v1000 = vrot.slane %v998, 5
      %v1001 = vsel %vm575, %v996, %v1000
      %v1003 = vshrl.u32 %v938, 16
      %v1005 = vrot.slane %v1003, 4
      %v1006 = vshll.u32 %v938, 16
      %v1008 = vrot.slane %v1006, 5
      %v1009 = vor.u32 %v1005, %v1008
      %v1010 = vrot.slane %v1009, 4
      %v1012 = vshll.u32 %v939, 16
      %v1014 = vrot.slane %v1012, 5
      %v1015 = vsel %vm575, %v1010, %v1014
      %v1017 = vshrl.u32 %v940, 16
      %v1019 = vrot.slane %v1017, 4
      %v1020 = vshll.u32 %v940, 16
      %v1022 = vrot.slane %v1020, 5
      %v1023 = vor.u32 %v1019, %v1022
      %v1024 = vrot.slane %v1023, 4
      %v1026 = vshll.u32 %v941, 16
      %v1028 = vrot.slane %v1026, 5
      %v1029 = vsel %vm575, %v1024, %v1028
      %v1031 = vshrl.u32 %v942, 16
      %v1033 = vrot.slane %v1031, 4
      %v1034 = vshll.u32 %v942, 16
      %v1036 = vrot.slane %v1034, 5
      %v1037 = vor.u32 %v1033, %v1036
      %v1038 = vrot.slane %v1037, 4
      %v1040 = vshll.u32 %v943, 16
      %v1042 = vrot.slane %v1040, 5
      %v1043 = vsel %vm575, %v1038, %v1042
      %v1045 = vshrl.u32 %v944, 16
      %v1047 = vrot.slane %v1045, 4
      %v1048 = vshll.u32 %v944, 16
      %v1050 = vrot.slane %v1048, 5
      %v1051 = vor.u32 %v1047, %v1050
      %v1052 = vrot.slane %v1051, 4
      %v1054 = vshll.u32 %v945, 16
      %v1056 = vrot.slane %v1054, 5
      %v1057 = vsel %vm575, %v1052, %v1056
      %s1058 = scalar_lea.vmem %s4, 20
      %v1059 = vld [vmem:[%s1058] sm:$0xf]
      %v1060 = vunpack.c.l.b16 %v959
      %v1061 = vunpack.c.l.b16 %v973
      %v1062 = vunpack.c.l.b16 %v987
      %v1063 = vunpack.c.l.b16 %v1001
      %v1064 = vunpack.c.l.b16 %v1015
      %v1065 = vunpack.c.l.b16 %v1029
      %v1066 = vunpack.c.l.b16 %v1043
      %v1067 = vunpack.c.l.b16 %v1057
      %v1068 = vpack.c.b16 %v1061, %v1060
      %v1069 = vpack.c.b16 %v1063, %v1062
      %v1070 = vpack.c.b16 %v1065, %v1064
      %v1071 = vpack.c.b16 %v1067, %v1066
      %v1073 = vsel %vm426, %v1059, 0
      %v1076 = vsel %vm426, %v1068, 0
      %v1079 = vsel %vm426, %v1069, 0
      %v1082 = vsel %vm426, %v1070, 0
      %v1085 = vsel %vm426, %v1071, 0
      %1087 = vmatprep.subr.bf16.mxu0 0
      %1088 = vmatpush1.bf16.xpose.msra.mxu0 %v1076
      %1089 = vmatprep.subr.bf16.mxu0 0
      %1090 = vmatpush1.bf16.xpose.msra.mxu0 %v1079
      %1091 = vmatprep.subr.bf16.mxu0 0
      %1092 = vmatpush1.bf16.xpose.msra.mxu0 %v1082
      %1093 = vmatprep.subr.bf16.mxu0 0
      %1094 = vmatpush1.bf16.xpose.msra.mxu0 %v1085
      %1095 = vmatprep.subr.bf16.mxu0 0
      %1096 = vmatpush1.bf16.xpose.msra.mxu0 0
      %1097 = vmatprep.subr.bf16.mxu0 0
      %1098 = vmatpush1.bf16.xpose.msra.mxu0 0
      %1099 = vmatprep.subr.bf16.mxu0 0
      %1100 = vmatpush1.bf16.xpose.msra.mxu0 0
      %1101 = vmatprep.subr.bf16.mxu0 0
      %1102 = vmatpush1.bf16.xpose.msra.mxu0 0
      %1103 = vmatprep.subr.bf16.mxu0 0
      %1104 = vmatpush1.bf16.xpose.msra.mxu0 0
      %1105 = vmatprep.subr.bf16.mxu0 0
      %1106 = vmatpush1.bf16.xpose.msra.mxu0 0
      %1107 = vmatprep.subr.bf16.mxu0 0
      %1108 = vmatpush1.bf16.xpose.msra.mxu0 0
      %1109 = vmatprep.subr.bf16.mxu0 0
      %1110 = vmatpush1.bf16.xpose.msra.mxu0 0
      %1111 = vmatprep.subr.bf16.mxu0 0
      %1112 = vmatpush1.bf16.xpose.msra.mxu0 0
      %1113 = vmatprep.subr.bf16.mxu0 0
      %1114 = vmatpush1.bf16.xpose.msra.mxu0 0
      %1115 = vmatprep.subr.bf16.mxu0 0
      %1116 = vmatpush1.bf16.xpose.msra.mxu0 0
      %1117 = vmatprep.subr.bf16.mxu0 0
      %1118 = vmatpush1.bf16.xpose.msra.mxu0 0
      %1119 = vmatprep.mubr.bf16.mxu0 0
      %1120 = vmatmul.mubr.bf16.gmra.mrb[0].mxu0 %v1073
      %v1121 = vpop.f32.mrb[0].mxu0
      %v1122 = vadd.f32 0.0, %v1121
      %v1123 = vpop.f32.mrb[0].mxu0
      %v1124 = vpop.f32.mrb[0].mxu0
      %v1125 = vpop.f32.mrb[0].mxu0
      %1126 = vdwg.mxu0
      %v1127 = vadd.f32 %v929, %v1122
      %s1128 = scalar_lea.vmem %s351, 8
      %v1129 = vld [vmem:[%s1128] sm:$0xf]
      %v1130 = vld [vmem:[%s1128 + $0x8] sm:$0xf]
      %v1131 = vld [vmem:[%s1128 + $0x10] sm:$0xf]
      %v1132 = vld [vmem:[%s1128 + $0x18] sm:$0xf]
      %v1133 = vld [vmem:[%s1128 + $0x20] sm:$0xf]
      %v1134 = vld [vmem:[%s1128 + $0x28] sm:$0xf]
      %v1135 = vld [vmem:[%s1128 + $0x30] sm:$0xf]
      %v1136 = vld [vmem:[%s1128 + $0x38] sm:$0xf]
      %s1137 = scalar_lea.vmem %s4, 24
      %v1138 = vld [vmem:[%s1137] sm:$0xf]
      %v1147 = vunpack.c.l.b16 %v1129
      %v1148 = vunpack.c.l.b16 %v1130
      %v1149 = vunpack.c.l.b16 %v1131
      %v1150 = vunpack.c.l.b16 %v1132
      %v1151 = vunpack.c.l.b16 %v1133
      %v1152 = vunpack.c.l.b16 %v1134
      %v1153 = vunpack.c.l.b16 %v1135
      %v1154 = vunpack.c.l.b16 %v1136
      %v1155 = vpack.c.b16 %v1148, %v1147
      %v1156 = vpack.c.b16 %v1150, %v1149
      %v1157 = vpack.c.b16 %v1152, %v1151
      %v1158 = vpack.c.b16 %v1154, %v1153
      %v1160 = vsel %vm426, %v1138, 0
      %v1163 = vsel %vm426, %v1155, 0
      %v1166 = vsel %vm426, %v1156, 0
      %v1169 = vsel %vm426, %v1157, 0
      %v1172 = vsel %vm426, %v1158, 0
      %1174 = vmatprep.subr.bf16.mxu0 0
      %1175 = vmatpush1.bf16.xpose.msra.mxu0 %v1163
      %1176 = vmatprep.subr.bf16.mxu0 0
      %1177 = vmatpush1.bf16.xpose.msra.mxu0 %v1166
      %1178 = vmatprep.subr.bf16.mxu0 0
      %1179 = vmatpush1.bf16.xpose.msra.mxu0 %v1169
      %1180 = vmatprep.subr.bf16.mxu0 0
      %1181 = vmatpush1.bf16.xpose.msra.mxu0 %v1172
      %1182 = vmatprep.subr.bf16.mxu0 0
      %1183 = vmatpush1.bf16.xpose.msra.mxu0 0
      %1184 = vmatprep.subr.bf16.mxu0 0
      %1185 = vmatpush1.bf16.xpose.msra.mxu0 0
      %1186 = vmatprep.subr.bf16.mxu0 0
      %1187 = vmatpush1.bf16.xpose.msra.mxu0 0
      %1188 = vmatprep.subr.bf16.mxu0 0
      %1189 = vmatpush1.bf16.xpose.msra.mxu0 0
      %1190 = vmatprep.subr.bf16.mxu0 0
      %1191 = vmatpush1.bf16.xpose.msra.mxu0 0
      %1192 = vmatprep.subr.bf16.mxu0 0
      %1193 = vmatpush1.bf16.xpose.msra.mxu0 0
      %1194 = vmatprep.subr.bf16.mxu0 0
      %1195 = vmatpush1.bf16.xpose.msra.mxu0 0
      %1196 = vmatprep.subr.bf16.mxu0 0
      %1197 = vmatpush1.bf16.xpose.msra.mxu0 0
      %1198 = vmatprep.subr.bf16.mxu0 0
      %1199 = vmatpush1.bf16.xpose.msra.mxu0 0
      %1200 = vmatprep.subr.bf16.mxu0 0
      %1201 = vmatpush1.bf16.xpose.msra.mxu0 0
      %1202 = vmatprep.subr.bf16.mxu0 0
      %1203 = vmatpush1.bf16.xpose.msra.mxu0 0
      %1204 = vmatprep.subr.bf16.mxu0 0
      %1205 = vmatpush1.bf16.xpose.msra.mxu0 0
      %1206 = vmatprep.mubr.bf16.mxu0 0
      %1207 = vmatmul.mubr.bf16.gmra.mrb[0].mxu0 %v1160
      %v1208 = vpop.f32.mrb[0].mxu0
      %v1209 = vadd.f32 0.0, %v1208
      %v1210 = vpop.f32.mrb[0].mxu0
      %v1211 = vpop.f32.mrb[0].mxu0
      %v1212 = vpop.f32.mrb[0].mxu0
      %1213 = vdwg.mxu0
      %v1214 = vadd.f32 %v1127, %v1209
      %s1215 = scalar_lea.vmem %s360, 8
      %v1216 = vld [vmem:[%s1215] sm:$0xf]
      %v1217 = vld [vmem:[%s1215 + $0x8] sm:$0xf]
      %v1218 = vld [vmem:[%s1215 + $0x10] sm:$0xf]
      %v1219 = vld [vmem:[%s1215 + $0x18] sm:$0xf]
      %v1220 = vld [vmem:[%s1215 + $0x20] sm:$0xf]
      %v1221 = vld [vmem:[%s1215 + $0x28] sm:$0xf]
      %v1222 = vld [vmem:[%s1215 + $0x30] sm:$0xf]
      %v1223 = vld [vmem:[%s1215 + $0x38] sm:$0xf]
      %s1224 = scalar_lea.vmem %s4, 28
      %v1225 = vld [vmem:[%s1224] sm:$0xf]
      %v1234 = vunpack.c.l.b16 %v1216
      %v1235 = vunpack.c.l.b16 %v1217
      %v1236 = vunpack.c.l.b16 %v1218
      %v1237 = vunpack.c.l.b16 %v1219
      %v1238 = vunpack.c.l.b16 %v1220
      %v1239 = vunpack.c.l.b16 %v1221
      %v1240 = vunpack.c.l.b16 %v1222
      %v1241 = vunpack.c.l.b16 %v1223
      %v1242 = vpack.c.b16 %v1235, %v1234
      %v1243 = vpack.c.b16 %v1237, %v1236
      %v1244 = vpack.c.b16 %v1239, %v1238
      %v1245 = vpack.c.b16 %v1241, %v1240
      %v1247 = vsel %vm426, %v1225, 0
      %v1250 = vsel %vm426, %v1242, 0
      %v1253 = vsel %vm426, %v1243, 0
      %v1256 = vsel %vm426, %v1244, 0
      %v1259 = vsel %vm426, %v1245, 0
      %1261 = vmatprep.subr.bf16.mxu0 0
      %1262 = vmatpush1.bf16.xpose.msra.mxu0 %v1250
      %1263 = vmatprep.subr.bf16.mxu0 0
      %1264 = vmatpush1.bf16.xpose.msra.mxu0 %v1253
      %1265 = vmatprep.subr.bf16.mxu0 0
      %1266 = vmatpush1.bf16.xpose.msra.mxu0 %v1256
      %1267 = vmatprep.subr.bf16.mxu0 0
      %1268 = vmatpush1.bf16.xpose.msra.mxu0 %v1259
      %1269 = vmatprep.subr.bf16.mxu0 0
      %1270 = vmatpush1.bf16.xpose.msra.mxu0 0
      %1271 = vmatprep.subr.bf16.mxu0 0
      %1272 = vmatpush1.bf16.xpose.msra.mxu0 0
      %1273 = vmatprep.subr.bf16.mxu0 0
      %1274 = vmatpush1.bf16.xpose.msra.mxu0 0
      %1275 = vmatprep.subr.bf16.mxu0 0
      %1276 = vmatpush1.bf16.xpose.msra.mxu0 0
      %1277 = vmatprep.subr.bf16.mxu0 0
      %1278 = vmatpush1.bf16.xpose.msra.mxu0 0
      %1279 = vmatprep.subr.bf16.mxu0 0
      %1280 = vmatpush1.bf16.xpose.msra.mxu0 0
      %1281 = vmatprep.subr.bf16.mxu0 0
      %1282 = vmatpush1.bf16.xpose.msra.mxu0 0
      %1283 = vmatprep.subr.bf16.mxu0 0
      %1284 = vmatpush1.bf16.xpose.msra.mxu0 0
      %1285 = vmatprep.subr.bf16.mxu0 0
      %1286 = vmatpush1.bf16.xpose.msra.mxu0 0
      %1287 = vmatprep.subr.bf16.mxu0 0
      %1288 = vmatpush1.bf16.xpose.msra.mxu0 0
      %1289 = vmatprep.subr.bf16.mxu0 0
      %1290 = vmatpush1.bf16.xpose.msra.mxu0 0
      %1291 = vmatprep.subr.bf16.mxu0 0
      %1292 = vmatpush1.bf16.xpose.msra.mxu0 0
      %1293 = vmatprep.mubr.bf16.mxu0 0
      %1294 = vmatmul.mubr.bf16.gmra.mrb[0].mxu0 %v1247
      %v1295 = vpop.f32.mrb[0].mxu0
      %v1296 = vadd.f32 0.0, %v1295
      %v1297 = vpop.f32.mrb[0].mxu0
      %v1298 = vpop.f32.mrb[0].mxu0
      %v1299 = vpop.f32.mrb[0].mxu0
      %1300 = vdwg.mxu0
      %v1301 = vadd.f32 %v1214, %v1296
      %v1302 = vld [vmem:[%s1128] sm:$0xf]
      %v1303 = vld [vmem:[%s1128 + $0x4] sm:$0x1]
      %v1304 = vld [vmem:[%s1128 + $0x8] sm:$0xf]
      %v1305 = vld [vmem:[%s1128 + $0xc] sm:$0x1]
      %v1306 = vld [vmem:[%s1128 + $0x10] sm:$0xf]
      %v1307 = vld [vmem:[%s1128 + $0x14] sm:$0x1]
      %v1308 = vld [vmem:[%s1128 + $0x18] sm:$0xf]
      %v1309 = vld [vmem:[%s1128 + $0x1c] sm:$0x1]
      %v1310 = vld [vmem:[%s1128 + $0x20] sm:$0xf]
      %v1311 = vld [vmem:[%s1128 + $0x24] sm:$0x1]
      %v1312 = vld [vmem:[%s1128 + $0x28] sm:$0xf]
      %v1313 = vld [vmem:[%s1128 + $0x2c] sm:$0x1]
      %v1314 = vld [vmem:[%s1128 + $0x30] sm:$0xf]
      %v1315 = vld [vmem:[%s1128 + $0x34] sm:$0x1]
      %v1316 = vld [vmem:[%s1128 + $0x38] sm:$0xf]
      %v1317 = vld [vmem:[%s1128 + $0x3c] sm:$0x1]
      %v1319 = vshrl.u32 %v1302, 16
      %v1321 = vrot.slane %v1319, 4
      %v1322 = vshll.u32 %v1302, 16
      %v1324 = vrot.slane %v1322, 5
      %v1325 = vor.u32 %v1321, %v1324
      %v1326 = vrot.slane %v1325, 4
      %v1328 = vshll.u32 %v1303, 16
      %v1330 = vrot.slane %v1328, 5
      %v1331 = vsel %vm575, %v1326, %v1330
      %v1333 = vshrl.u32 %v1304, 16
      %v1335 = vrot.slane %v1333, 4
      %v1336 = vshll.u32 %v1304, 16
      %v1338 = vrot.slane %v1336, 5
      %v1339 = vor.u32 %v1335, %v1338
      %v1340 = vrot.slane %v1339, 4
      %v1342 = vshll.u32 %v1305, 16
      %v1344 = vrot.slane %v1342, 5
      %v1345 = vsel %vm575, %v1340, %v1344
      %v1347 = vshrl.u32 %v1306, 16
      %v1349 = vrot.slane %v1347, 4
      %v1350 = vshll.u32 %v1306, 16
      %v1352 = vrot.slane %v1350, 5
      %v1353 = vor.u32 %v1349, %v1352
      %v1354 = vrot.slane %v1353, 4
      %v1356 = vshll.u32 %v1307, 16
      %v1358 = vrot.slane %v1356, 5
      %v1359 = vsel %vm575, %v1354, %v1358
      %v1361 = vshrl.u32 %v1308, 16
      %v1363 = vrot.slane %v1361, 4
      %v1364 = vshll.u32 %v1308, 16
      %v1366 = vrot.slane %v1364, 5
      %v1367 = vor.u32 %v1363, %v1366
      %v1368 = vrot.slane %v1367, 4
      %v1370 = vshll.u32 %v1309, 16
      %v1372 = vrot.slane %v1370, 5
      %v1373 = vsel %vm575, %v1368, %v1372
      %v1375 = vshrl.u32 %v1310, 16
      %v1377 = vrot.slane %v1375, 4
      %v1378 = vshll.u32 %v1310, 16
      %v1380 = vrot.slane %v1378, 5
      %v1381 = vor.u32 %v1377, %v1380
      %v1382 = vrot.slane %v1381, 4
      %v1384 = vshll.u32 %v1311, 16
      %v1386 = vrot.slane %v1384, 5
      %v1387 = vsel %vm575, %v1382, %v1386
      %v1389 = vshrl.u32 %v1312, 16
      %v1391 = vrot.slane %v1389, 4
      %v1392 = vshll.u32 %v1312, 16
      %v1394 = vrot.slane %v1392, 5
      %v1395 = vor.u32 %v1391, %v1394
      %v1396 = vrot.slane %v1395, 4
      %v1398 = vshll.u32 %v1313, 16
      %v1400 = vrot.slane %v1398, 5
      %v1401 = vsel %vm575, %v1396, %v1400
      %v1403 = vshrl.u32 %v1314, 16
      %v1405 = vrot.slane %v1403, 4
      %v1406 = vshll.u32 %v1314, 16
      %v1408 = vrot.slane %v1406, 5
      %v1409 = vor.u32 %v1405, %v1408
      %v1410 = vrot.slane %v1409, 4
      %v1412 = vshll.u32 %v1315, 16
      %v1414 = vrot.slane %v1412, 5
      %v1415 = vsel %vm575, %v1410, %v1414
      %v1417 = vshrl.u32 %v1316, 16
      %v1419 = vrot.slane %v1417, 4
      %v1420 = vshll.u32 %v1316, 16
      %v1422 = vrot.slane %v1420, 5
      %v1423 = vor.u32 %v1419, %v1422
      %v1424 = vrot.slane %v1423, 4
      %v1426 = vshll.u32 %v1317, 16
      %v1428 = vrot.slane %v1426, 5
      %v1429 = vsel %vm575, %v1424, %v1428
      %s1430 = scalar_lea.vmem %s4, 32
      %v1431 = vld [vmem:[%s1430] sm:$0xf]
      %v1432 = vunpack.c.l.b16 %v1331
      %v1433 = vunpack.c.l.b16 %v1345
      %v1434 = vunpack.c.l.b16 %v1359
      %v1435 = vunpack.c.l.b16 %v1373
      %v1436 = vunpack.c.l.b16 %v1387
      %v1437 = vunpack.c.l.b16 %v1401
      %v1438 = vunpack.c.l.b16 %v1415
      %v1439 = vunpack.c.l.b16 %v1429
      %v1440 = vpack.c.b16 %v1433, %v1432
      %v1441 = vpack.c.b16 %v1435, %v1434
      %v1442 = vpack.c.b16 %v1437, %v1436
      %v1443 = vpack.c.b16 %v1439, %v1438
      %v1445 = vsel %vm426, %v1431, 0
      %v1448 = vsel %vm426, %v1440, 0
      %v1451 = vsel %vm426, %v1441, 0
      %v1454 = vsel %vm426, %v1442, 0
      %v1457 = vsel %vm426, %v1443, 0
      %1459 = vmatprep.subr.bf16.mxu0 0
      %1460 = vmatpush1.bf16.xpose.msra.mxu0 %v1448
      %1461 = vmatprep.subr.bf16.mxu0 0
      %1462 = vmatpush1.bf16.xpose.msra.mxu0 %v1451
      %1463 = vmatprep.subr.bf16.mxu0 0
      %1464 = vmatpush1.bf16.xpose.msra.mxu0 %v1454
      %1465 = vmatprep.subr.bf16.mxu0 0
      %1466 = vmatpush1.bf16.xpose.msra.mxu0 %v1457
      %1467 = vmatprep.subr.bf16.mxu0 0
      %1468 = vmatpush1.bf16.xpose.msra.mxu0 0
      %1469 = vmatprep.subr.bf16.mxu0 0
      %1470 = vmatpush1.bf16.xpose.msra.mxu0 0
      %1471 = vmatprep.subr.bf16.mxu0 0
      %1472 = vmatpush1.bf16.xpose.msra.mxu0 0
      %1473 = vmatprep.subr.bf16.mxu0 0
      %1474 = vmatpush1.bf16.xpose.msra.mxu0 0
      %1475 = vmatprep.subr.bf16.mxu0 0
      %1476 = vmatpush1.bf16.xpose.msra.mxu0 0
      %1477 = vmatprep.subr.bf16.mxu0 0
      %1478 = vmatpush1.bf16.xpose.msra.mxu0 0
      %1479 = vmatprep.subr.bf16.mxu0 0
      %1480 = vmatpush1.bf16.xpose.msra.mxu0 0
      %1481 = vmatprep.subr.bf16.mxu0 0
      %1482 = vmatpush1.bf16.xpose.msra.mxu0 0
      %1483 = vmatprep.subr.bf16.mxu0 0
      %1484 = vmatpush1.bf16.xpose.msra.mxu0 0
      %1485 = vmatprep.subr.bf16.mxu0 0
      %1486 = vmatpush1.bf16.xpose.msra.mxu0 0
      %1487 = vmatprep.subr.bf16.mxu0 0
      %1488 = vmatpush1.bf16.xpose.msra.mxu0 0
      %1489 = vmatprep.subr.bf16.mxu0 0
      %1490 = vmatpush1.bf16.xpose.msra.mxu0 0
      %1491 = vmatprep.mubr.bf16.mxu0 0
      %1492 = vmatmul.mubr.bf16.gmra.mrb[0].mxu0 %v1445
      %v1493 = vpop.f32.mrb[0].mxu0
      %v1494 = vadd.f32 0.0, %v1493
      %v1495 = vpop.f32.mrb[0].mxu0
      %v1496 = vpop.f32.mrb[0].mxu0
      %v1497 = vpop.f32.mrb[0].mxu0
      %1498 = vdwg.mxu0
      %v1499 = vadd.f32 %v1301, %v1494
      %v1500 = vld [vmem:[%s5] sm:$0xff]
      %1502 = vset.pattern.permute.xlu0 0
      %1503 = vperm.xlu0 %1502, %v1500
      %v1504 = vpop.permute.xlu0 %1503
      %v1506 = vadd.f32 %v1499, %v1504
      %vm1507 = vcmask 523264
      %1508 = vst.msk [vmem:[%s385] sm:$0xff] %vm1507, %v1506
      %p1509 = scmp.lt.s32.totalorder %s21, 1
      %s1510 = scalar_select %p1509, %s21, 1
      %p1511 = scmp.lt.s32.totalorder %s22, 0
      %s1512 = scalar_select %p1511, %s22, 0
      %s1513 = sadd.s32 %s1512, %s1510
      %s1514 = smul.addr %s1513, 8
      %s1515 = scalar_lea.vmem %s6, %s1514
      // Predicated region
      $region45: #{conv_delta_forward.1} parent=43 // pred_check
        %p1516 = pneg %p203
      $region46: #{conv_delta_forward.1} parent=43 // pred_check_branch
        %1518 = sbr.rel (%p1516) target = $region48
      $region47: #{conv_delta_forward.1} parent=43 // pred_region
        _
      $region48: #{conv_delta_forward.1} parent=43 // pred_fallthru
        _
    $region44: #{conv_delta_forward.1} parent=5 // pred_fallthru
      _
    %p1519 = scmp.le.s32.totalorder 2, %s12
    // Predicated region
    $region49: #{conv_delta_forward.1} parent=5 // pred_check
      %p1520 = pneg %p1519
    $region50: #{conv_delta_forward.1} parent=5 // pred_check_branch
      %1522 = sbr.rel (%p1520) target = $region52
    $region51: #{conv_delta_forward.1} parent=5 // pred_region
      %s1523 = ssub.s32 %s12, 2
      // Predicated region
      $region53: #{conv_delta_forward.1} parent=51 // pred_check
        %p1524 = pneg %p209
      $region54: #{conv_delta_forward.1} parent=51 // pred_check_branch
        %1526 = sbr.rel (%p1524) target = $region56
      $region55: #{conv_delta_forward.1} parent=51 // pred_region
        %p1527 = scmp.lt.s32.totalorder %s23, 1
        %s1528 = scalar_select %p1527, %s23, 1
        %p1529 = scmp.lt.s32.totalorder %s24, 0
        %s1530 = scalar_select %p1529, %s24, 0
        %s1531 = sadd.s32 %s1530, %s1528
        %s1532 = smul.addr %s1531, 8
        %s1533 = scalar_lea.vmem %s6, %s1532
      $region56: #{conv_delta_forward.1} parent=51 // pred_fallthru
        _
    $region52: #{conv_delta_forward.1} parent=5 // pred_fallthru
      _
  $region6: #{conv_delta_forward.1} parent=0 // loop_footer
    %s16 = sadd.s32 1, %s12
  $region7: #{conv_delta_forward.1} parent=0 // loop_footer_branch
    %11 = sbr.rel target = $region3
  $region8: #{conv_delta_forward.1} parent=0 // loop_exit
    _

</llo_original>
